<compile_context>
chip_gen: v7x
topology: tpu7x:2x2x1
jax: 0.10.0
libtpu: 0.0.40
codegen_flags: <defaults>
</compile_context>

<pallas_src>
import math

import jax
import jax.numpy as jnp
from jax.experimental import pallas as pl
from jax.experimental.pallas import tpu as pltpu


# ----------------------------------------------------------------------------
# Wrapper-side weight lowering (pure layout plumbing, done once per call).
# ----------------------------------------------------------------------------
def _banded_conv_weight(w, in_w, out_w):
    """Lower a conv weight to a banded matmul operand.

    w: (KH, KW, Cin, Cout).  Returns M of shape (KH*in_w*Cin, out_w*Cout) with
    M[(kh, x, ci), (ow, co)] = w[kh, x - ow, ci, co] when 0 <= x - ow < KW,
    else 0.  Columns are then permuted to (ow % 2, ow // 2, co) so that the
    horizontal step of a 2x2 max-pool is a max over the two column halves.
    """
    KH, KW, Cin, Cout = w.shape
    x = jnp.arange(in_w)[:, None]
    ow = jnp.arange(out_w)[None, :]
    kw = x - ow                                           # (in_w, out_w)
    valid = (kw >= 0) & (kw < KW)
    g = w[:, jnp.clip(kw, 0, KW - 1)]                     # (KH, in_w, out_w, Cin, Cout)
    g = jnp.where(valid[None, :, :, None, None], g, 0.0)
    g = jnp.transpose(g, (0, 1, 3, 2, 4))                 # (KH, in_w, Cin, out_w, Cout)
    m = g.reshape(KH * in_w * Cin, out_w * Cout)
    # permute columns (ow, co) -> (ow % 2, ow // 2, co)
    m = m.reshape(-1, out_w // 2, 2, Cout).transpose(0, 2, 1, 3)
    return m.reshape(KH * in_w * Cin, out_w * Cout)


# ----------------------------------------------------------------------------
# Fused LeNet forward kernel.
# ----------------------------------------------------------------------------
def lenet_kernel(x_ref, w1_ref, b1_ref, w2_ref, b2_ref,
                 f1_ref, g1_ref, f2_ref, g2_ref, f3_ref, g3_ref,
                 out_ref, s1_ref, s2_ref):
    B = out_ref.shape[0]
    bf16, f32 = jnp.bfloat16, jnp.float32

    def mm(a, w_ref):
        # bf16 MXU operands, f32 accumulation (no Precision.HIGHEST).
        return jnp.dot(a.astype(bf16), w_ref[...], preferred_element_type=f32)

    # ---- conv1 + ReLU: one (B*28, 160) x (160, 168) MXU matmul -------------
    # lhs rows = (b, oh); lanes = (kh, x): 5 row-shifted slices of the image.
    xv = x_ref[...]                                               # (B*32, 32)
    lhs1 = jnp.concatenate(
        [jnp.concatenate([xv[b * 32 + kh: b * 32 + kh + 28, :]
                          for b in range(B)], axis=0)
         for kh in range(5)], axis=1)                             # (B*28, 160)
    c1 = jnp.maximum(mm(lhs1, w1_ref) + b1_ref[...], 0.0)         # (B*28, 168)

    # ---- maxpool 2x2 #1 -----------------------------------------------------
    # Columns are ordered (ow%2, ow//2, co): horizontal max = max of halves.
    l1 = jnp.maximum(c1[:, :84], c1[:, 84:])                      # (B*28, 84)
    s1_ref[...] = l1                                              # vertical max:
    h1 = jnp.maximum(s1_ref[pl.ds(0, B * 14, stride=2), :],       # even rows
                     s1_ref[pl.ds(1, B * 14, stride=2), :])       # odd rows
    # h1: (B*14, 84) -- rows (b, i), lanes (j, ci)

    # ---- conv2 + ReLU: one (B*10, 420) x (420, 160) MXU matmul -------------
    lhs2 = jnp.concatenate(
        [jnp.concatenate([h1[b * 14 + kh: b * 14 + kh + 10, :]
                          for b in range(B)], axis=0)
         for kh in range(5)], axis=1)                             # (B*10, 420)
    c2 = jnp.maximum(mm(lhs2, w2_ref) + b2_ref[...], 0.0)         # (B*10, 160)

    # ---- maxpool 2x2 #2 -----------------------------------------------------
    l2 = jnp.maximum(c2[:, :80], c2[:, 80:])                      # (B*10, 80)
    s2_ref[...] = l2
    h2 = jnp.maximum(s2_ref[pl.ds(0, B * 5, stride=2), :],
                     s2_ref[pl.ds(1, B * 5, stride=2), :])        # (B*5, 80)

    # ---- flatten to (B, 400), lane order (h, w, c) --------------------------
    flat = jnp.concatenate(
        [jnp.concatenate([h2[b * 5 + r: b * 5 + r + 1, :] for r in range(5)],
                         axis=1)
         for b in range(B)], axis=0)                              # (B, 400)

    # ---- fc1 -> fc2 -> fc3 (single K=400 / 120 / 84 matmuls) ----------------
    z = jnp.maximum(mm(flat, f1_ref) + g1_ref[...], 0.0)          # (B, 120)
    z = jnp.maximum(mm(z, f2_ref) + g2_ref[...], 0.0)             # (B, 84)
    out_ref[...] = mm(z, f3_ref) + g3_ref[...]                    # (B, 128) padded


def lenet_forward(x_nchw, params):
    """x_nchw: (B, 1, 32, 32) float32.  params: PyTorch-convention LeNet params."""
    (cw1, cb1, cw2, cb2, fw1, fb1, fw2, fb2, fw3, fb3) = params
    B = x_nchw.shape[0]
    bf16, f32 = jnp.bfloat16, jnp.float32

    # Input as a (B*32, 32) matrix: rows = (b, y), lanes = x.
    x2d = x_nchw.reshape(B * 32, 32).astype(f32)

    # Conv weights to (KH, KW, Cin, Cout), then lowered to banded matrices.
    w1b = _banded_conv_weight(jnp.transpose(cw1, (2, 3, 1, 0)), 32, 28).astype(bf16)  # (160, 168)
    w2b = _banded_conv_weight(jnp.transpose(cw2, (2, 3, 1, 0)), 14, 10).astype(bf16)  # (420, 160)
    b1r = jnp.tile(cb1, 28).reshape(1, 168).astype(f32)   # per-column bias (co minor)
    b2r = jnp.tile(cb2, 10).reshape(1, 160).astype(f32)

    # fc1 rows reordered to the kernel's (h, w, c) flatten order.
    f1 = jnp.transpose(fw1.reshape(120, 16, 5, 5), (2, 3, 1, 0)).reshape(400, 120).astype(bf16)
    g1 = fb1.reshape(1, 120).astype(f32)
    f2 = fw2.T.astype(bf16)                                # (120, 84)
    g2 = fb2.reshape(1, 84).astype(f32)
    # fc3 padded to 128 output lanes (lane-dense final store); sliced to 10 below.
    f3 = jnp.zeros((84, 128), bf16).at[:, :10].set(fw3.T.astype(bf16))
    g3 = jnp.zeros((1, 128), f32).at[:, :10].set(fb3.reshape(1, 10).astype(f32))

    args = (x2d, w1b, b1r, w2b, b2r, f1, g1, f2, g2, f3, g3)
    vmem = pl.BlockSpec(memory_space=pltpu.MemorySpace.VMEM)
    out = pl.pallas_call(
        lenet_kernel,
        out_shape=jax.ShapeDtypeStruct((B, 128), f32),
        in_specs=[vmem] * len(args),
        out_specs=vmem,
        scratch_shapes=[pltpu.VMEM((B * 28, 84), f32),     # pool1 vertical step
                        pltpu.VMEM((B * 10, 80), f32)],    # pool2 vertical step
    )(*args)
    return out[:, :10]


# ----------------------------------------------------------------------------
# Pure-JAX reference mirroring the PyTorch module (NCHW, full f32 precision).
# ----------------------------------------------------------------------------
def lenet_ref(x, params):
    (cw1, cb1, cw2, cb2, fw1, fb1, fw2, fb2, fw3, fb3) = params
    hi = jax.lax.Precision.HIGHEST

    def conv(v, w, b):
        y = jax.lax.conv_general_dilated(
            v, w, (1, 1), 'VALID',
            dimension_numbers=('NCHW', 'OIHW', 'NCHW'), precision=hi)
        return y + b[None, :, None, None]

    def pool(v):
        Bn, C, H, W = v.shape
        return v.reshape(Bn, C, H // 2, 2, W // 2, 2).max(axis=(3, 5))

    h = pool(jax.nn.relu(conv(x, cw1, cb1)))
    h = pool(jax.nn.relu(conv(h, cw2, cb2)))
    h = h.reshape(x.shape[0], -1)
    h = jax.nn.relu(jnp.dot(h, fw1.T, precision=hi) + fb1)
    h = jax.nn.relu(jnp.dot(h, fw2.T, precision=hi) + fb2)
    return jnp.dot(h, fw3.T, precision=hi) + fb3


if __name__ == "__main__":
    key = jax.random.PRNGKey(0)
    kx, *kp = jax.random.split(key, 11)

    def uinit(k, shape, fan_in):
        bound = 1.0 / math.sqrt(fan_in)
        return jax.random.uniform(k, shape, jnp.float32, minval=-bound, maxval=bound)

    params = (
        uinit(kp[0], (6, 1, 5, 5), 25),     # conv1.weight
        uinit(kp[1], (6,), 25),             # conv1.bias
        uinit(kp[2], (16, 6, 5, 5), 150),   # conv2.weight
        uinit(kp[3], (16,), 150),           # conv2.bias
        uinit(kp[4], (120, 400), 400),      # fc1.weight
        uinit(kp[5], (120,), 400),          # fc1.bias
        uinit(kp[6], (84, 120), 120),       # fc2.weight
        uinit(kp[7], (84,), 120),           # fc2.bias
        uinit(kp[8], (10, 84), 84),         # fc3.weight
        uinit(kp[9], (10,), 84),            # fc3.bias
    )

    # LeNet needs 1x32x32 inputs so the flatten size is 16*5*5 = 400; batch = 2.
    x = jax.random.normal(kx, (2, 1, 32, 32), jnp.float32)

    out = jax.block_until_ready(lenet_forward(x, params))
    ref = jax.block_until_ready(lenet_ref(x, params))

    assert out.shape == (2, 10) and out.dtype == jnp.float32
    err = float(jnp.max(jnp.abs(out - ref)))
    # bf16 MXU operands with f32 accumulation -> small rounding vs. the f32 ref.
    assert err < 2e-2, f"mismatch vs reference: {err}"
    print("KERNEL_OK")
</pallas_src>

<mosaic_0001>
module attributes {stable_mosaic.version = 11 : i64} {
  func.func @lenet_kernel(%arg0: memref<64x32xf32, #tpu.memory_space<vmem>>, %arg1: memref<160x168xbf16, #tpu.memory_space<vmem>>, %arg2: memref<1x168xf32, #tpu.memory_space<vmem>>, %arg3: memref<420x160xbf16, #tpu.memory_space<vmem>>, %arg4: memref<1x160xf32, #tpu.memory_space<vmem>>, %arg5: memref<400x120xbf16, #tpu.memory_space<vmem>>, %arg6: memref<1x120xf32, #tpu.memory_space<vmem>>, %arg7: memref<120x84xbf16, #tpu.memory_space<vmem>>, %arg8: memref<1x84xf32, #tpu.memory_space<vmem>>, %arg9: memref<84x128xbf16, #tpu.memory_space<vmem>>, %arg10: memref<1x128xf32, #tpu.memory_space<vmem>>, %arg11: memref<2x128xf32, #tpu.memory_space<vmem>>, %arg12: memref<56x84xf32, #tpu.memory_space<vmem>>, %arg13: memref<20x80xf32, #tpu.memory_space<vmem>>) attributes {dimension_semantics = [], scalar_prefetch = 0 : i64, scratch_operands = 2 : i64, tpu.core_type = #tpu.core_type<tc>} {
    %c0 = arith.constant 0 : index
    %c0_0 = arith.constant 0 : index
    %0 = vector.load %arg0[%c0, %c0_0] : memref<64x32xf32, #tpu.memory_space<vmem>>, vector<64x32xf32>
    %1 = vector.extract_strided_slice %0 {offsets = [0, 0], sizes = [28, 32], strides = [1, 1]} : vector<64x32xf32> to vector<28x32xf32>
    %2 = vector.extract_strided_slice %0 {offsets = [32, 0], sizes = [28, 32], strides = [1, 1]} : vector<64x32xf32> to vector<28x32xf32>
    %3 = tpu.concatenate %1, %2 in 0 : vector<28x32xf32>, vector<28x32xf32> -> vector<56x32xf32>
    %4 = vector.extract_strided_slice %0 {offsets = [1, 0], sizes = [28, 32], strides = [1, 1]} : vector<64x32xf32> to vector<28x32xf32>
    %5 = vector.extract_strided_slice %0 {offsets = [33, 0], sizes = [28, 32], strides = [1, 1]} : vector<64x32xf32> to vector<28x32xf32>
    %6 = tpu.concatenate %4, %5 in 0 : vector<28x32xf32>, vector<28x32xf32> -> vector<56x32xf32>
    %7 = vector.extract_strided_slice %0 {offsets = [2, 0], sizes = [28, 32], strides = [1, 1]} : vector<64x32xf32> to vector<28x32xf32>
    %8 = vector.extract_strided_slice %0 {offsets = [34, 0], sizes = [28, 32], strides = [1, 1]} : vector<64x32xf32> to vector<28x32xf32>
    %9 = tpu.concatenate %7, %8 in 0 : vector<28x32xf32>, vector<28x32xf32> -> vector<56x32xf32>
    %10 = vector.extract_strided_slice %0 {offsets = [3, 0], sizes = [28, 32], strides = [1, 1]} : vector<64x32xf32> to vector<28x32xf32>
    %11 = vector.extract_strided_slice %0 {offsets = [35, 0], sizes = [28, 32], strides = [1, 1]} : vector<64x32xf32> to vector<28x32xf32>
    %12 = tpu.concatenate %10, %11 in 0 : vector<28x32xf32>, vector<28x32xf32> -> vector<56x32xf32>
    %13 = vector.extract_strided_slice %0 {offsets = [4, 0], sizes = [28, 32], strides = [1, 1]} : vector<64x32xf32> to vector<28x32xf32>
    %14 = vector.extract_strided_slice %0 {offsets = [36, 0], sizes = [28, 32], strides = [1, 1]} : vector<64x32xf32> to vector<28x32xf32>
    %15 = tpu.concatenate %13, %14 in 0 : vector<28x32xf32>, vector<28x32xf32> -> vector<56x32xf32>
    %16 = tpu.concatenate %3, %6, %9, %12, %15 in 1 : vector<56x32xf32>, vector<56x32xf32>, vector<56x32xf32>, vector<56x32xf32>, vector<56x32xf32> -> vector<56x160xf32>
    %17 = arith.truncf %16 : vector<56x160xf32> to vector<56x160xbf16>
    %c0_1 = arith.constant 0 : index
    %c0_2 = arith.constant 0 : index
    %18 = vector.load %arg1[%c0_1, %c0_2] : memref<160x168xbf16, #tpu.memory_space<vmem>>, vector<160x168xbf16>
    %cst = arith.constant dense<0.000000e+00> : vector<56x168xf32>
    %19 = tpu.matmul %17, %18, %cst {dimension_numbers = #tpu.dot_dimension_numbers<[1], [0], [0], [1], [0, 0, 1, 1], [], []>} : vector<56x160xbf16>, vector<160x168xbf16>, vector<56x168xf32> -> vector<56x168xf32>
    %c0_3 = arith.constant 0 : index
    %c0_4 = arith.constant 0 : index
    %20 = vector.load %arg2[%c0_3, %c0_4] : memref<1x168xf32, #tpu.memory_space<vmem>>, vector<1x168xf32>
    %21 = vector.broadcast %20 : vector<1x168xf32> to vector<56x168xf32>
    %22 = arith.addf %19, %21 : vector<56x168xf32>
    %cst_5 = arith.constant 0.000000e+00 : f32
    %23 = vector.broadcast %cst_5 : f32 to vector<56x168xf32>
    %24 = arith.maximumf %22, %23 : vector<56x168xf32>
    %25 = vector.extract_strided_slice %24 {offsets = [0, 0], sizes = [56, 84], strides = [1, 1]} : vector<56x168xf32> to vector<56x84xf32>
    %26 = vector.extract_strided_slice %24 {offsets = [0, 84], sizes = [56, 84], strides = [1, 1]} : vector<56x168xf32> to vector<56x84xf32>
    %27 = arith.maximumf %25, %26 : vector<56x84xf32>
    %c0_6 = arith.constant 0 : index
    %c0_7 = arith.constant 0 : index
    %28 = vector.load %arg12[%c0_6, %c0_7] : memref<56x84xf32, #tpu.memory_space<vmem>>, vector<56x84xf32>
    tpu.vector_store %arg12[%c0_6, %c0_7], %27 {strides = array<i32>} : memref<56x84xf32, #tpu.memory_space<vmem>>, vector<56x84xf32>,
    %c0_8 = arith.constant 0 : index
    %c0_9 = arith.constant 0 : index
    %29 = tpu.strided_load %arg12[%c0_8, %c0_9] {strides = array<i32: 2, 1>} : memref<56x84xf32, #tpu.memory_space<vmem>>, vector<28x84xf32>
    %c1 = arith.constant 1 : index
    %c0_10 = arith.constant 0 : index
    %30 = tpu.strided_load %arg12[%c1, %c0_10] {strides = array<i32: 2, 1>} : memref<56x84xf32, #tpu.memory_space<vmem>>, vector<28x84xf32>
    %31 = arith.maximumf %29, %30 : vector<28x84xf32>
    %32 = vector.extract_strided_slice %31 {offsets = [0, 0], sizes = [10, 84], strides = [1, 1]} : vector<28x84xf32> to vector<10x84xf32>
    %33 = vector.extract_strided_slice %31 {offsets = [14, 0], sizes = [10, 84], strides = [1, 1]} : vector<28x84xf32> to vector<10x84xf32>
    %34 = tpu.concatenate %32, %33 in 0 : vector<10x84xf32>, vector<10x84xf32> -> vector<20x84xf32>
    %35 = vector.extract_strided_slice %31 {offsets = [1, 0], sizes = [10, 84], strides = [1, 1]} : vector<28x84xf32> to vector<10x84xf32>
    %36 = vector.extract_strided_slice %31 {offsets = [15, 0], sizes = [10, 84], strides = [1, 1]} : vector<28x84xf32> to vector<10x84xf32>
    %37 = tpu.concatenate %35, %36 in 0 : vector<10x84xf32>, vector<10x84xf32> -> vector<20x84xf32>
    %38 = vector.extract_strided_slice %31 {offsets = [2, 0], sizes = [10, 84], strides = [1, 1]} : vector<28x84xf32> to vector<10x84xf32>
    %39 = vector.extract_strided_slice %31 {offsets = [16, 0], sizes = [10, 84], strides = [1, 1]} : vector<28x84xf32> to vector<10x84xf32>
    %40 = tpu.concatenate %38, %39 in 0 : vector<10x84xf32>, vector<10x84xf32> -> vector<20x84xf32>
    %41 = vector.extract_strided_slice %31 {offsets = [3, 0], sizes = [10, 84], strides = [1, 1]} : vector<28x84xf32> to vector<10x84xf32>
    %42 = vector.extract_strided_slice %31 {offsets = [17, 0], sizes = [10, 84], strides = [1, 1]} : vector<28x84xf32> to vector<10x84xf32>
    %43 = tpu.concatenate %41, %42 in 0 : vector<10x84xf32>, vector<10x84xf32> -> vector<20x84xf32>
    %44 = vector.extract_strided_slice %31 {offsets = [4, 0], sizes = [10, 84], strides = [1, 1]} : vector<28x84xf32> to vector<10x84xf32>
    %45 = vector.extract_strided_slice %31 {offsets = [18, 0], sizes = [10, 84], strides = [1, 1]} : vector<28x84xf32> to vector<10x84xf32>
    %46 = tpu.concatenate %44, %45 in 0 : vector<10x84xf32>, vector<10x84xf32> -> vector<20x84xf32>
    %47 = tpu.concatenate %34, %37, %40, %43, %46 in 1 : vector<20x84xf32>, vector<20x84xf32>, vector<20x84xf32>, vector<20x84xf32>, vector<20x84xf32> -> vector<20x420xf32>
    %48 = arith.truncf %47 : vector<20x420xf32> to vector<20x420xbf16>
    %c0_11 = arith.constant 0 : index
    %c0_12 = arith.constant 0 : index
    %49 = vector.load %arg3[%c0_11, %c0_12] : memref<420x160xbf16, #tpu.memory_space<vmem>>, vector<420x160xbf16>
    %cst_13 = arith.constant dense<0.000000e+00> : vector<20x160xf32>
    %50 = tpu.matmul %48, %49, %cst_13 {dimension_numbers = #tpu.dot_dimension_numbers<[1], [0], [0], [1], [0, 0, 1, 1], [], []>} : vector<20x420xbf16>, vector<420x160xbf16>, vector<20x160xf32> -> vector<20x160xf32>
    %c0_14 = arith.constant 0 : index
    %c0_15 = arith.constant 0 : index
    %51 = vector.load %arg4[%c0_14, %c0_15] : memref<1x160xf32, #tpu.memory_space<vmem>>, vector<1x160xf32>
    %52 = vector.broadcast %51 : vector<1x160xf32> to vector<20x160xf32>
    %53 = arith.addf %50, %52 : vector<20x160xf32>
    %cst_16 = arith.constant 0.000000e+00 : f32
    %54 = vector.broadcast %cst_16 : f32 to vector<20x160xf32>
    %55 = arith.maximumf %53, %54 : vector<20x160xf32>
    %56 = vector.extract_strided_slice %55 {offsets = [0, 0], sizes = [20, 80], strides = [1, 1]} : vector<20x160xf32> to vector<20x80xf32>
    %57 = vector.extract_strided_slice %55 {offsets = [0, 80], sizes = [20, 80], strides = [1, 1]} : vector<20x160xf32> to vector<20x80xf32>
    %58 = arith.maximumf %56, %57 : vector<20x80xf32>
    %c0_17 = arith.constant 0 : index
    %c0_18 = arith.constant 0 : index
    %59 = vector.load %arg13[%c0_17, %c0_18] : memref<20x80xf32, #tpu.memory_space<vmem>>, vector<20x80xf32>
    tpu.vector_store %arg13[%c0_17, %c0_18], %58 {strides = array<i32>} : memref<20x80xf32, #tpu.memory_space<vmem>>, vector<20x80xf32>,
    %c0_19 = arith.constant 0 : index
    %c0_20 = arith.constant 0 : index
    %60 = tpu.strided_load %arg13[%c0_19, %c0_20] {strides = array<i32: 2, 1>} : memref<20x80xf32, #tpu.memory_space<vmem>>, vector<10x80xf32>
    %c1_21 = arith.constant 1 : index
    %c0_22 = arith.constant 0 : index
    %61 = tpu.strided_load %arg13[%c1_21, %c0_22] {strides = array<i32: 2, 1>} : memref<20x80xf32, #tpu.memory_space<vmem>>, vector<10x80xf32>
    %62 = arith.maximumf %60, %61 : vector<10x80xf32>
    %63 = vector.extract_strided_slice %62 {offsets = [0, 0], sizes = [1, 80], strides = [1, 1]} : vector<10x80xf32> to vector<1x80xf32>
    %64 = vector.extract_strided_slice %62 {offsets = [1, 0], sizes = [1, 80], strides = [1, 1]} : vector<10x80xf32> to vector<1x80xf32>
    %65 = vector.extract_strided_slice %62 {offsets = [2, 0], sizes = [1, 80], strides = [1, 1]} : vector<10x80xf32> to vector<1x80xf32>
    %66 = vector.extract_strided_slice %62 {offsets = [3, 0], sizes = [1, 80], strides = [1, 1]} : vector<10x80xf32> to vector<1x80xf32>
    %67 = vector.extract_strided_slice %62 {offsets = [4, 0], sizes = [1, 80], strides = [1, 1]} : vector<10x80xf32> to vector<1x80xf32>
    %68 = tpu.concatenate %63, %64, %65, %66, %67 in 1 : vector<1x80xf32>, vector<1x80xf32>, vector<1x80xf32>, vector<1x80xf32>, vector<1x80xf32> -> vector<1x400xf32>
    %69 = vector.extract_strided_slice %62 {offsets = [5, 0], sizes = [1, 80], strides = [1, 1]} : vector<10x80xf32> to vector<1x80xf32>
    %70 = vector.extract_strided_slice %62 {offsets = [6, 0], sizes = [1, 80], strides = [1, 1]} : vector<10x80xf32> to vector<1x80xf32>
    %71 = vector.extract_strided_slice %62 {offsets = [7, 0], sizes = [1, 80], strides = [1, 1]} : vector<10x80xf32> to vector<1x80xf32>
    %72 = vector.extract_strided_slice %62 {offsets = [8, 0], sizes = [1, 80], strides = [1, 1]} : vector<10x80xf32> to vector<1x80xf32>
    %73 = vector.extract_strided_slice %62 {offsets = [9, 0], sizes = [1, 80], strides = [1, 1]} : vector<10x80xf32> to vector<1x80xf32>
    %74 = tpu.concatenate %69, %70, %71, %72, %73 in 1 : vector<1x80xf32>, vector<1x80xf32>, vector<1x80xf32>, vector<1x80xf32>, vector<1x80xf32> -> vector<1x400xf32>
    %75 = tpu.concatenate %68, %74 in 0 : vector<1x400xf32>, vector<1x400xf32> -> vector<2x400xf32>
    %76 = arith.truncf %75 : vector<2x400xf32> to vector<2x400xbf16>
    %c0_23 = arith.constant 0 : index
    %c0_24 = arith.constant 0 : index
    %77 = vector.load %arg5[%c0_23, %c0_24] : memref<400x120xbf16, #tpu.memory_space<vmem>>, vector<400x120xbf16>
    %cst_25 = arith.constant dense<0.000000e+00> : vector<2x120xf32>
    %78 = tpu.matmul %76, %77, %cst_25 {dimension_numbers = #tpu.dot_dimension_numbers<[1], [0], [0], [1], [0, 0, 1, 1], [], []>} : vector<2x400xbf16>, vector<400x120xbf16>, vector<2x120xf32> -> vector<2x120xf32>
    %c0_26 = arith.constant 0 : index
    %c0_27 = arith.constant 0 : index
    %79 = vector.load %arg6[%c0_26, %c0_27] : memref<1x120xf32, #tpu.memory_space<vmem>>, vector<1x120xf32>
    %80 = vector.broadcast %79 : vector<1x120xf32> to vector<2x120xf32>
    %81 = arith.addf %78, %80 : vector<2x120xf32>
    %cst_28 = arith.constant 0.000000e+00 : f32
    %82 = vector.broadcast %cst_28 : f32 to vector<2x120xf32>
    %83 = arith.maximumf %81, %82 : vector<2x120xf32>
    %84 = arith.truncf %83 : vector<2x120xf32> to vector<2x120xbf16>
    %c0_29 = arith.constant 0 : index
    %c0_30 = arith.constant 0 : index
    %85 = vector.load %arg7[%c0_29, %c0_30] : memref<120x84xbf16, #tpu.memory_space<vmem>>, vector<120x84xbf16>
    %cst_31 = arith.constant dense<0.000000e+00> : vector<2x84xf32>
    %86 = tpu.matmul %84, %85, %cst_31 {dimension_numbers = #tpu.dot_dimension_numbers<[1], [0], [0], [1], [0, 0, 1, 1], [], []>} : vector<2x120xbf16>, vector<120x84xbf16>, vector<2x84xf32> -> vector<2x84xf32>
    %c0_32 = arith.constant 0 : index
    %c0_33 = arith.constant 0 : index
    %87 = vector.load %arg8[%c0_32, %c0_33] : memref<1x84xf32, #tpu.memory_space<vmem>>, vector<1x84xf32>
    %88 = vector.broadcast %87 : vector<1x84xf32> to vector<2x84xf32>
    %89 = arith.addf %86, %88 : vector<2x84xf32>
    %cst_34 = arith.constant 0.000000e+00 : f32
    %90 = vector.broadcast %cst_34 : f32 to vector<2x84xf32>
    %91 = arith.maximumf %89, %90 : vector<2x84xf32>
    %92 = arith.truncf %91 : vector<2x84xf32> to vector<2x84xbf16>
    %c0_35 = arith.constant 0 : index
    %c0_36 = arith.constant 0 : index
    %93 = vector.load %arg9[%c0_35, %c0_36] : memref<84x128xbf16, #tpu.memory_space<vmem>>, vector<84x128xbf16>
    %cst_37 = arith.constant dense<0.000000e+00> : vector<2x128xf32>
    %94 = tpu.matmul %92, %93, %cst_37 {dimension_numbers = #tpu.dot_dimension_numbers<[1], [0], [0], [1], [0, 0, 1, 1], [], []>} : vector<2x84xbf16>, vector<84x128xbf16>, vector<2x128xf32> -> vector<2x128xf32>
    %c0_38 = arith.constant 0 : index
    %c0_39 = arith.constant 0 : index
    %95 = vector.load %arg10[%c0_38, %c0_39] : memref<1x128xf32, #tpu.memory_space<vmem>>, vector<1x128xf32>
    %96 = vector.broadcast %95 : vector<1x128xf32> to vector<2x128xf32>
    %97 = arith.addf %94, %96 : vector<2x128xf32>
    %c0_40 = arith.constant 0 : index
    %c0_41 = arith.constant 0 : index
    %98 = vector.load %arg11[%c0_40, %c0_41] : memref<2x128xf32, #tpu.memory_space<vmem>>, vector<2x128xf32>
    tpu.vector_store %arg11[%c0_40, %c0_41], %97 {strides = array<i32>} : memref<2x128xf32, #tpu.memory_space<vmem>>, vector<2x128xf32>,
    return
  }
}

</mosaic_0001>

<llo_original>
// kernel: tpu_custom_call.1
$region0: #{tpu_custom_call.1}
  #allocation0 [shape = 'u32[]', space=smem, size = 0x4, offset = 0x4, fixed_abs, tag = 'smem constant byte address 0x4 - core index']
  #allocation1 [shape = 'u32[144,128]{1,0:T(1,128)}', space=vmem, size = 0x12000, scoped, tag = 'internal scratch']
  #allocation2 [shape = 'f32[56,84]{1,0:T(8,128)}', space=vmem, size = 0x7000, scoped, tag = 'scratch operand']
  #allocation3 [shape = 'f32[20,80]{1,0:T(8,128)}', space=vmem, size = 0x3000, scoped, tag = 'scratch operand']
  %s0 = inlined_call_operand.vmem [shape: f32[64,32], index: 0, kind: input, shape index: {}]
  %s1 = inlined_call_operand.vmem [shape: bf16[160,168], index: 1, kind: input, shape index: {}]
  %s2 = inlined_call_operand.vmem [shape: f32[1,168], index: 2, kind: input, shape index: {}]
  %s3 = inlined_call_operand.vmem [shape: bf16[420,160], index: 3, kind: input, shape index: {}]
  %s4 = inlined_call_operand.vmem [shape: f32[1,160], index: 4, kind: input, shape index: {}]
  %s5 = inlined_call_operand.vmem [shape: bf16[400,120], index: 5, kind: input, shape index: {}]
  %s6 = inlined_call_operand.vmem [shape: f32[1,120], index: 6, kind: input, shape index: {}]
  %s7 = inlined_call_operand.vmem [shape: bf16[120,84], index: 7, kind: input, shape index: {}]
  %s8 = inlined_call_operand.vmem [shape: f32[1,84], index: 8, kind: input, shape index: {}]
  %s9 = inlined_call_operand.vmem [shape: bf16[84,128], index: 9, kind: input, shape index: {}]
  %s10 = inlined_call_operand.vmem [shape: f32[1,128], index: 10, kind: input, shape index: {}]
  %s11 = inlined_call_operand.hbm [shape: f32[2,128], index: 11, kind: output, shape index: {}]
  %s12 = sld [smem:[#allocation0]]
  $region54: #{tpu_custom_call.1} parent=0
    _
  %s14 = ssub.s32 1, %s12
  %s15 = scalar_select 0, %s14, %s12
  $region1: #{tpu_custom_call.1} parent=0
    #allocation4 [shape = 'u8[1024]{0}', space=vmem, size = 0x400, scoped, tag = 'output window, operand 0, single buffered']
    #allocation5 [shape = 's32[1]{0}', space=sflag, size = 0x4, scoped, tag = 'scoped memory for tpu_custom_call.1']
    %16 = vsyncpa [#allocation5], 0
    // Predicated region
    $region2: #{tpu_custom_call.1} parent=1 // pred_check
      _
    $region3: #{tpu_custom_call.1} parent=1 // pred_check_branch
      %18 = sbr.rel (0) target = $region5
    $region4: #{tpu_custom_call.1} parent=1 // pred_region
      _
    $region5: #{tpu_custom_call.1} parent=1 // pred_fallthru
      _
    // Predicated region
    $region6: #{tpu_custom_call.1} parent=1 // pred_check
      _
    $region7: #{tpu_custom_call.1} parent=1 // pred_check_branch
      %20 = sbr.rel (0) target = $region9
    $region8: #{tpu_custom_call.1} parent=1 // pred_region
      _
    $region9: #{tpu_custom_call.1} parent=1 // pred_fallthru
      _
    // Predicated region
    $region10: #{tpu_custom_call.1} parent=1 // pred_check
      _
    $region11: #{tpu_custom_call.1} parent=1 // pred_check_branch
      %22 = sbr.rel (0) target = $region13
    $region12: #{tpu_custom_call.1} parent=1 // pred_region
      _
    $region13: #{tpu_custom_call.1} parent=1 // pred_fallthru
      _
    // Predicated region
    $region14: #{tpu_custom_call.1} parent=1 // pred_check
      _
    $region15: #{tpu_custom_call.1} parent=1 // pred_check_branch
      %24 = sbr.rel (0) target = $region17
    $region16: #{tpu_custom_call.1} parent=1 // pred_region
      _
    $region17: #{tpu_custom_call.1} parent=1 // pred_fallthru
      _
    // Predicated region
    $region18: #{tpu_custom_call.1} parent=1 // pred_check
      _
    $region19: #{tpu_custom_call.1} parent=1 // pred_check_branch
      %26 = sbr.rel (0) target = $region21
    $region20: #{tpu_custom_call.1} parent=1 // pred_region
      _
    $region21: #{tpu_custom_call.1} parent=1 // pred_fallthru
      _
    // Predicated region
    $region22: #{tpu_custom_call.1} parent=1 // pred_check
      _
    $region23: #{tpu_custom_call.1} parent=1 // pred_check_branch
      %28 = sbr.rel (0) target = $region25
    $region24: #{tpu_custom_call.1} parent=1 // pred_region
      _
    $region25: #{tpu_custom_call.1} parent=1 // pred_fallthru
      _
    // Predicated region
    $region26: #{tpu_custom_call.1} parent=1 // pred_check
      _
    $region27: #{tpu_custom_call.1} parent=1 // pred_check_branch
      %30 = sbr.rel (0) target = $region29
    $region28: #{tpu_custom_call.1} parent=1 // pred_region
      _
    $region29: #{tpu_custom_call.1} parent=1 // pred_fallthru
      _
    // Predicated region
    $region30: #{tpu_custom_call.1} parent=1 // pred_check
      _
    $region31: #{tpu_custom_call.1} parent=1 // pred_check_branch
      %32 = sbr.rel (0) target = $region33
    $region32: #{tpu_custom_call.1} parent=1 // pred_region
      _
    $region33: #{tpu_custom_call.1} parent=1 // pred_fallthru
      _
    // Predicated region
    $region34: #{tpu_custom_call.1} parent=1 // pred_check
      _
    $region35: #{tpu_custom_call.1} parent=1 // pred_check_branch
      %34 = sbr.rel (0) target = $region37
    $region36: #{tpu_custom_call.1} parent=1 // pred_region
      _
    $region37: #{tpu_custom_call.1} parent=1 // pred_fallthru
      _
    // Predicated region
    $region38: #{tpu_custom_call.1} parent=1 // pred_check
      _
    $region39: #{tpu_custom_call.1} parent=1 // pred_check_branch
      %36 = sbr.rel (0) target = $region41
    $region40: #{tpu_custom_call.1} parent=1 // pred_region
      _
    $region41: #{tpu_custom_call.1} parent=1 // pred_fallthru
      _
    // Predicated region
    $region42: #{tpu_custom_call.1} parent=1 // pred_check
      _
    $region43: #{tpu_custom_call.1} parent=1 // pred_check_branch
      %38 = sbr.rel (0) target = $region45
    $region44: #{tpu_custom_call.1} parent=1 // pred_region
      _
    $region45: #{tpu_custom_call.1} parent=1 // pred_fallthru
      _
    %v40 = vld [vmem:[%s0] sm:$0xff]
    %v41 = vld [vmem:[%s0 + $0x8] sm:$0xff]
    %v42 = vld [vmem:[%s0 + $0x10] sm:$0xff]
    %v43 = vld [vmem:[%s0 + $0x18] sm:$0xff]
    %v44 = vld [vmem:[%s0 + $0x20] sm:$0xff]
    %v45 = vld [vmem:[%s0 + $0x28] sm:$0xff]
    %v46 = vld [vmem:[%s0 + $0x30] sm:$0xff]
    %v47 = vld [vmem:[%s0 + $0x38] sm:$0xff]
    %vm52 = vcmask 1043456
    %v53 = vrot.slane %v44, 4
    %v54 = vrot.slane %v45, 4
    %v55 = vsel %vm52, %v53, %v54
    %v56 = vrot.slane %v46, 4
    %v57 = vsel %vm52, %v54, %v56
    %v58 = vrot.slane %v47, 4
    %v59 = vsel %vm52, %v56, %v58
    %v64 = vsel %vm52, %v43, %v53
    %vm69 = vcmask 1046528
    %v70 = vrot.slane %v40, 1
    %v71 = vrot.slane %v41, 1
    %v72 = vsel %vm69, %v70, %v71
    %v73 = vrot.slane %v42, 1
    %v74 = vsel %vm69, %v71, %v73
    %v75 = vrot.slane %v43, 1
    %v76 = vsel %vm69, %v73, %v75
    %vm78 = vcmask 1042432
    %v79 = vrot.slane %v44, 5
    %v80 = vrot.slane %v45, 5
    %v81 = vsel %vm78, %v79, %v80
    %v82 = vrot.slane %v46, 5
    %v83 = vsel %vm78, %v80, %v82
    %v84 = vrot.slane %v47, 5
    %v85 = vsel %vm78, %v82, %v84
    %v87 = vsel %vm52, %v75, %v79
    %vm88 = vcmask 1045504
    %v89 = vrot.slane %v40, 2
    %v90 = vrot.slane %v41, 2
    %v91 = vsel %vm88, %v89, %v90
    %v92 = vrot.slane %v42, 2
    %v93 = vsel %vm88, %v90, %v92
    %v94 = vrot.slane %v43, 2
    %v95 = vsel %vm88, %v92, %v94
    %vm97 = vcmask 1041408
    %v98 = vrot.slane %v44, 6
    %v99 = vrot.slane %v45, 6
    %v100 = vsel %vm97, %v98, %v99
    %v101 = vrot.slane %v46, 6
    %v102 = vsel %vm97, %v99, %v101
    %v103 = vrot.slane %v47, 6
    %v104 = vsel %vm97, %v101, %v103
    %v106 = vsel %vm52, %v94, %v98
    %vm107 = vcmask 1044480
    %v108 = vrot.slane %v40, 3
    %v109 = vrot.slane %v41, 3
    %v110 = vsel %vm107, %v108, %v109
    %v111 = vrot.slane %v42, 3
    %v112 = vsel %vm107, %v109, %v111
    %v113 = vrot.slane %v43, 3
    %v114 = vsel %vm107, %v111, %v113
    %vm116 = vcmask 1040384
    %v117 = vrot.slane %v44, 7
    %v118 = vrot.slane %v45, 7
    %v119 = vsel %vm116, %v117, %v118
    %v120 = vrot.slane %v46, 7
    %v121 = vsel %vm116, %v118, %v120
    %v122 = vrot.slane %v47, 7
    %v123 = vsel %vm116, %v120, %v122
    %v125 = vsel %vm52, %v113, %v117
    %v126 = vrot.slane %v40, 4
    %v127 = vrot.slane %v41, 4
    %v128 = vsel %vm52, %v126, %v127
    %v129 = vrot.slane %v42, 4
    %v130 = vsel %vm52, %v127, %v129
    %v131 = vrot.slane %v43, 4
    %v132 = vsel %vm52, %v129, %v131
    %v137 = vsel %vm52, %v131, %v44
    %139 = vrot.lane.b32.xlu0 %v72, 32
    %v140 = vpop.permute.xlu0 %139
    %141 = vrot.lane.b32.xlu0 %v74, 32
    %v142 = vpop.permute.xlu0 %141
    %143 = vrot.lane.b32.xlu0 %v76, 32
    %v144 = vpop.permute.xlu0 %143
    %145 = vrot.lane.b32.xlu0 %v87, 32
    %v146 = vpop.permute.xlu0 %145
    %147 = vrot.lane.b32.xlu0 %v81, 32
    %v148 = vpop.permute.xlu0 %147
    %149 = vrot.lane.b32.xlu0 %v83, 32
    %v150 = vpop.permute.xlu0 %149
    %151 = vrot.lane.b32.xlu0 %v85, 32
    %v152 = vpop.permute.xlu0 %151
    %161 = vrot.lane.b32.xlu0 %v91, 64
    %v162 = vpop.permute.xlu0 %161
    %163 = vrot.lane.b32.xlu0 %v93, 64
    %v164 = vpop.permute.xlu0 %163
    %165 = vrot.lane.b32.xlu0 %v95, 64
    %v166 = vpop.permute.xlu0 %165
    %167 = vrot.lane.b32.xlu0 %v106, 64
    %v168 = vpop.permute.xlu0 %167
    %169 = vrot.lane.b32.xlu0 %v100, 64
    %v170 = vpop.permute.xlu0 %169
    %171 = vrot.lane.b32.xlu0 %v102, 64
    %v172 = vpop.permute.xlu0 %171
    %173 = vrot.lane.b32.xlu0 %v104, 64
    %v174 = vpop.permute.xlu0 %173
    %183 = vrot.lane.b32.xlu0 %v110, 96
    %v184 = vpop.permute.xlu0 %183
    %185 = vrot.lane.b32.xlu0 %v112, 96
    %v186 = vpop.permute.xlu0 %185
    %187 = vrot.lane.b32.xlu0 %v114, 96
    %v188 = vpop.permute.xlu0 %187
    %189 = vrot.lane.b32.xlu0 %v125, 96
    %v190 = vpop.permute.xlu0 %189
    %191 = vrot.lane.b32.xlu0 %v119, 96
    %v192 = vpop.permute.xlu0 %191
    %193 = vrot.lane.b32.xlu0 %v121, 96
    %v194 = vpop.permute.xlu0 %193
    %195 = vrot.lane.b32.xlu0 %v123, 96
    %v196 = vpop.permute.xlu0 %195
    %vm204 = vcmask 261120
    %v205 = vsel %vm204, %v40, %v140
    %v206 = vsel %vm204, %v41, %v142
    %v207 = vsel %vm204, %v42, %v144
    %v208 = vsel %vm204, %v64, %v146
    %v209 = vsel %vm204, %v55, %v148
    %v210 = vsel %vm204, %v57, %v150
    %v211 = vsel %vm204, %v59, %v152
    %vm212 = vcmask 523264
    %v213 = vsel %vm212, %v205, %v162
    %v214 = vsel %vm212, %v206, %v164
    %v215 = vsel %vm212, %v207, %v166
    %v216 = vsel %vm212, %v208, %v168
    %v217 = vsel %vm212, %v209, %v170
    %v218 = vsel %vm212, %v210, %v172
    %v219 = vsel %vm212, %v211, %v174
    %vm220 = vcmask 785408
    %v221 = vsel %vm220, %v213, %v184
    %v222 = vsel %vm220, %v214, %v186
    %v223 = vsel %vm220, %v215, %v188
    %v224 = vsel %vm220, %v216, %v190
    %v225 = vsel %vm220, %v217, %v192
    %v226 = vsel %vm220, %v218, %v194
    %v227 = vsel %vm220, %v219, %v196
    %v228 = vpack.c.bf16 %v222, %v221
    %v229 = vpack.c.bf16 %v130, %v128
    %v230 = vpack.c.bf16 %v224, %v223
    %v231 = vpack.c.bf16 %v137, %v132
    %v232 = vpack.c.bf16 %v226, %v225
    %v233 = vpack.c.bf16 %v46, %v45
    %v234 = vpack.c.bf16 %v227, %v227
    %v235 = vpack.c.bf16 %v47, %v47
    %v236 = vld [vmem:[%s1] sm:$0xff]
    %v237 = vld [vmem:[%s1 + $0x8] sm:$0xff]
    %v238 = vld [vmem:[%s1 + $0x10] sm:$0xff]
    %v239 = vld [vmem:[%s1 + $0x18] sm:$0xff]
    %v240 = vld [vmem:[%s1 + $0x20] sm:$0xff]
    %v241 = vld [vmem:[%s1 + $0x28] sm:$0xff]
    %v242 = vld [vmem:[%s1 + $0x30] sm:$0xff]
    %v243 = vld [vmem:[%s1 + $0x38] sm:$0xff]
    %v244 = vld [vmem:[%s1 + $0x40] sm:$0xff]
    %v245 = vld [vmem:[%s1 + $0x48] sm:$0xff]
    %v246 = vld [vmem:[%s1 + $0x50] sm:$0xff]
    %v247 = vld [vmem:[%s1 + $0x58] sm:$0xff]
    %v248 = vld [vmem:[%s1 + $0x60] sm:$0xff]
    %v249 = vld [vmem:[%s1 + $0x68] sm:$0xff]
    %v250 = vld [vmem:[%s1 + $0x70] sm:$0xff]
    %v251 = vld [vmem:[%s1 + $0x78] sm:$0xff]
    %v252 = vld [vmem:[%s1 + $0x80] sm:$0xff]
    %v253 = vld [vmem:[%s1 + $0x88] sm:$0xff]
    %v254 = vld [vmem:[%s1 + $0x90] sm:$0xff]
    %v255 = vld [vmem:[%s1 + $0x98] sm:$0xff]
    %v256 = vld [vmem:[%s2] sm:$0x3]
    %v258 = vlaneseq
    %v259 = vshrl.u32 %v258, 7
    %v260 = vsub.s32 0, %v259
    %v261 = vrot.slane %v256, %v260
    %v262 = vlaneseq
    %v263 = vshrl.u32 %v262, 7
    %v264 = vsub.s32 1, %v263
    %v265 = vrot.slane %v256, %v264
    %v288 = vunpack.c.l.b16 %v236
    %v289 = vunpack.c.h.b16 %v236
    %v290 = vunpack.c.l.b16 %v237
    %v291 = vunpack.c.h.b16 %v237
    %v292 = vunpack.c.l.b16 %v238
    %v293 = vunpack.c.h.b16 %v238
    %v294 = vunpack.c.l.b16 %v239
    %v295 = vunpack.c.h.b16 %v239
    %v296 = vunpack.c.l.b16 %v240
    %v297 = vunpack.c.h.b16 %v240
    %v298 = vunpack.c.l.b16 %v241
    %v299 = vunpack.c.h.b16 %v241
    %v300 = vunpack.c.l.b16 %v242
    %v301 = vunpack.c.h.b16 %v242
    %v302 = vunpack.c.l.b16 %v243
    %v303 = vunpack.c.h.b16 %v243
    %v304 = vunpack.c.l.b16 %v244
    %v305 = vunpack.c.h.b16 %v244
    %v306 = vunpack.c.l.b16 %v245
    %v307 = vunpack.c.h.b16 %v245
    %v308 = vunpack.c.l.b16 %v246
    %v309 = vunpack.c.h.b16 %v246
    %v310 = vunpack.c.l.b16 %v247
    %v311 = vunpack.c.h.b16 %v247
    %v312 = vunpack.c.l.b16 %v248
    %v313 = vunpack.c.h.b16 %v248
    %v314 = vunpack.c.l.b16 %v249
    %v315 = vunpack.c.h.b16 %v249
    %v316 = vunpack.c.l.b16 %v250
    %v317 = vunpack.c.h.b16 %v250
    %v318 = vunpack.c.l.b16 %v251
    %v319 = vunpack.c.h.b16 %v251
    %v320 = vunpack.c.l.b16 %v252
    %v321 = vunpack.c.h.b16 %v252
    %v322 = vunpack.c.l.b16 %v253
    %v323 = vunpack.c.h.b16 %v253
    %v324 = vunpack.c.l.b16 %v254
    %v325 = vunpack.c.h.b16 %v254
    %v326 = vunpack.c.l.b16 %v255
    %v327 = vunpack.c.h.b16 %v255
    %v328 = vpack.c.b16 %v290, %v288
    %v329 = vpack.c.b16 %v291, %v289
    %v330 = vpack.c.b16 %v294, %v292
    %v331 = vpack.c.b16 %v295, %v293
    %v332 = vpack.c.b16 %v298, %v296
    %v333 = vpack.c.b16 %v299, %v297
    %v334 = vpack.c.b16 %v302, %v300
    %v335 = vpack.c.b16 %v303, %v301
    %v336 = vpack.c.b16 %v306, %v304
    %v337 = vpack.c.b16 %v307, %v305
    %v338 = vpack.c.b16 %v310, %v308
    %v339 = vpack.c.b16 %v311, %v309
    %v340 = vpack.c.b16 %v314, %v312
    %v341 = vpack.c.b16 %v315, %v313
    %v342 = vpack.c.b16 %v318, %v316
    %v343 = vpack.c.b16 %v319, %v317
    %v344 = vpack.c.b16 %v322, %v320
    %v345 = vpack.c.b16 %v323, %v321
    %v346 = vpack.c.b16 %v326, %v324
    %v347 = vpack.c.b16 %v327, %v325
    %v369 = vsel %vm204, %v229, 0
    %v372 = vsel %vm204, %v231, 0
    %v375 = vsel %vm204, %v233, 0
    %v378 = vsel %vm204, %v235, 0
    %380 = vmatprep.subr.bf16.mxu0 %v329
    %381 = vmatpush1.bf16.msra.mxu0 %v328
    %382 = vmatprep.subr.bf16.mxu0 %v331
    %383 = vmatpush1.bf16.msra.mxu0 %v330
    %384 = vmatprep.subr.bf16.mxu0 %v333
    %385 = vmatpush1.bf16.msra.mxu0 %v332
    %386 = vmatprep.subr.bf16.mxu0 %v335
    %387 = vmatpush1.bf16.msra.mxu0 %v334
    %388 = vmatprep.subr.bf16.mxu0 %v337
    %389 = vmatpush1.bf16.msra.mxu0 %v336
    %390 = vmatprep.subr.bf16.mxu0 %v339
    %391 = vmatpush1.bf16.msra.mxu0 %v338
    %392 = vmatprep.subr.bf16.mxu0 %v341
    %393 = vmatpush1.bf16.msra.mxu0 %v340
    %394 = vmatprep.subr.bf16.mxu0 %v343
    %395 = vmatpush1.bf16.msra.mxu0 %v342
    %396 = vmatprep.subr.bf16.mxu0 %v345
    %397 = vmatpush1.bf16.msra.mxu0 %v344
    %398 = vmatprep.subr.bf16.mxu0 %v347
    %399 = vmatpush1.bf16.msra.mxu0 %v346
    %400 = vmatprep.subr.bf16.mxu0 0
    %401 = vmatpush1.bf16.msra.mxu0 0
    %402 = vmatprep.subr.bf16.mxu0 0
    %403 = vmatpush1.bf16.msra.mxu0 0
    %404 = vmatprep.subr.bf16.mxu0 0
    %405 = vmatpush1.bf16.msra.mxu0 0
    %406 = vmatprep.subr.bf16.mxu0 0
    %407 = vmatpush1.bf16.msra.mxu0 0
    %408 = vmatprep.subr.bf16.mxu0 0
    %409 = vmatpush1.bf16.msra.mxu0 0
    %410 = vmatprep.subr.bf16.mxu0 0
    %411 = vmatpush1.bf16.msra.mxu0 0
    %412 = vmatprep.mubr.bf16.mxu0 %v369
    %413 = vmatmul.mubr.bf16.gmra.mrb[0].mxu0 %v228
    %v414 = vpop.f32.mrb[0].mxu0
    %v415 = vadd.f32 %v261, %v414
    %v416 = vpop.f32.mrb[0].mxu0
    %v417 = vadd.f32 %v265, %v416
    %v418 = vpop.f32.mrb[0].mxu0
    %v419 = vadd.f32 %v261, %v418
    %v420 = vpop.f32.mrb[0].mxu0
    %v421 = vadd.f32 %v265, %v420
    %422 = vmatprep.mubr.bf16.mxu0 %v372
    %423 = vmatmul.mubr.bf16.gmra.mrb[0].mxu0 %v230
    %v424 = vpop.f32.mrb[0].mxu0
    %v425 = vadd.f32 %v261, %v424
    %v426 = vpop.f32.mrb[0].mxu0
    %v427 = vadd.f32 %v265, %v426
    %v428 = vpop.f32.mrb[0].mxu0
    %v429 = vadd.f32 %v261, %v428
    %v430 = vpop.f32.mrb[0].mxu0
    %v431 = vadd.f32 %v265, %v430
    %432 = vmatprep.mubr.bf16.mxu0 %v375
    %433 = vmatmul.mubr.bf16.gmra.mrb[0].mxu0 %v232
    %v434 = vpop.f32.mrb[0].mxu0
    %v435 = vadd.f32 %v261, %v434
    %v436 = vpop.f32.mrb[0].mxu0
    %v437 = vadd.f32 %v265, %v436
    %v438 = vpop.f32.mrb[0].mxu0
    %v439 = vadd.f32 %v261, %v438
    %v440 = vpop.f32.mrb[0].mxu0
    %v441 = vadd.f32 %v265, %v440
    %442 = vmatprep.mubr.bf16.mxu0 %v378
    %443 = vmatmul.mubr.bf16.gmra.mrb[0].mxu0 %v234
    %v444 = vpop.f32.mrb[0].mxu0
    %v445 = vadd.f32 %v261, %v444
    %v446 = vpop.f32.mrb[0].mxu0
    %v447 = vadd.f32 %v265, %v446
    %v448 = vpop.f32.mrb[0].mxu0
    %v449 = vpop.f32.mrb[0].mxu0
    %450 = vdwg.mxu0
    %v451 = vmax.f32 %v415, 0.0
    %v452 = vmax.f32 %v417, 0.0
    %v453 = vmax.f32 %v419, 0.0
    %v454 = vmax.f32 %v421, 0.0
    %v455 = vmax.f32 %v425, 0.0
    %v456 = vmax.f32 %v427, 0.0
    %v457 = vmax.f32 %v429, 0.0
    %v458 = vmax.f32 %v431, 0.0
    %v459 = vmax.f32 %v435, 0.0
    %v460 = vmax.f32 %v437, 0.0
    %v461 = vmax.f32 %v439, 0.0
    %v462 = vmax.f32 %v441, 0.0
    %v463 = vmax.f32 %v445, 0.0
    %v464 = vmax.f32 %v447, 0.0
    %479 = vrot.lane.b32.xlu0 %v451, 44
    %v480 = vpop.permute.xlu0 %479
    %481 = vrot.lane.b32.xlu0 %v452, 44
    %v482 = vpop.permute.xlu0 %481
    %483 = vrot.lane.b32.xlu0 %v453, 44
    %v484 = vpop.permute.xlu0 %483
    %485 = vrot.lane.b32.xlu0 %v454, 44
    %v486 = vpop.permute.xlu0 %485
    %487 = vrot.lane.b32.xlu0 %v455, 44
    %v488 = vpop.permute.xlu0 %487
    %489 = vrot.lane.b32.xlu0 %v456, 44
    %v490 = vpop.permute.xlu0 %489
    %491 = vrot.lane.b32.xlu0 %v457, 44
    %v492 = vpop.permute.xlu0 %491
    %493 = vrot.lane.b32.xlu0 %v458, 44
    %v494 = vpop.permute.xlu0 %493
    %495 = vrot.lane.b32.xlu0 %v459, 44
    %v496 = vpop.permute.xlu0 %495
    %497 = vrot.lane.b32.xlu0 %v460, 44
    %v498 = vpop.permute.xlu0 %497
    %499 = vrot.lane.b32.xlu0 %v461, 44
    %v500 = vpop.permute.xlu0 %499
    %501 = vrot.lane.b32.xlu0 %v462, 44
    %v502 = vpop.permute.xlu0 %501
    %503 = vrot.lane.b32.xlu0 %v463, 44
    %v504 = vpop.permute.xlu0 %503
    %505 = vrot.lane.b32.xlu0 %v464, 44
    %v506 = vpop.permute.xlu0 %505
    %vm507 = vcmask 359424
    %v508 = vsel %vm507, %v480, %v482
    %v509 = vsel %vm507, %v484, %v486
    %v510 = vsel %vm507, %v488, %v490
    %v511 = vsel %vm507, %v492, %v494
    %v512 = vsel %vm507, %v496, %v498
    %v513 = vsel %vm507, %v500, %v502
    %v514 = vsel %vm507, %v504, %v506
    %v522 = vmax.f32 %v451, %v508
    %v523 = vmax.f32 %v453, %v509
    %v524 = vmax.f32 %v455, %v510
    %v525 = vmax.f32 %v457, %v511
    %v526 = vmax.f32 %v459, %v512
    %v527 = vmax.f32 %v461, %v513
    %v528 = vmax.f32 %v463, %v514
    %vm529 = vcmask 687104
    %530 = vst.msk [vmem:[#allocation2] sm:$0xff] %vm529, %v522
    %531 = vst.msk [vmem:[#allocation2 + $0x8] sm:$0xff] %vm529, %v523
    %532 = vst.msk [vmem:[#allocation2 + $0x10] sm:$0xff] %vm529, %v524
    %533 = vst.msk [vmem:[#allocation2 + $0x18] sm:$0xff] %vm529, %v525
    %534 = vst.msk [vmem:[#allocation2 + $0x20] sm:$0xff] %vm529, %v526
    %535 = vst.msk [vmem:[#allocation2 + $0x28] sm:$0xff] %vm529, %v527
    %536 = vst.msk [vmem:[#allocation2 + $0x30] sm:$0xff] %vm529, %v528
    %v537 = vld [vmem:[#allocation2] ss:$2 sm:$0xff]
    %s538 = scalar_lea.vmem [#allocation2], 16
    %v539 = vld [vmem:[%s538] ss:$2 sm:$0xff]
    %s540 = scalar_lea.vmem [#allocation2], 32
    %v541 = vld [vmem:[%s540] ss:$2 sm:$0xff]
    %s542 = scalar_lea.vmem [#allocation2], 48
    %v543 = vld [vmem:[%s542] ss:$2 sm:$0xf]
    %s544 = scalar_lea.vmem [#allocation2], 1
    %v545 = vld [vmem:[%s544] ss:$2 sm:$0xff]
    %s546 = scalar_lea.vmem [#allocation2], 17
    %v547 = vld [vmem:[%s546] ss:$2 sm:$0xff]
    %s548 = scalar_lea.vmem [#allocation2], 33
    %v549 = vld [vmem:[%s548] ss:$2 sm:$0xff]
    %s550 = scalar_lea.vmem [#allocation2], 49
    %v551 = vld [vmem:[%s550] ss:$2 sm:$0xf]
    %v552 = vmax.f32 %v537, %v545
    %v553 = vmax.f32 %v539, %v547
    %v554 = vmax.f32 %v541, %v549
    %v555 = vmax.f32 %v543, %v551
    %v558 = vrot.slane %v553, 4
    %v559 = vrot.slane %v554, 4
    %v560 = vsel %vm52, %v558, %v559
    %v563 = vsel %vm97, %v553, %v560
    %v565 = vrot.slane %v552, 1
    %v566 = vrot.slane %v553, 1
    %v567 = vsel %vm69, %v565, %v566
    %v570 = vrot.slane %v553, 5
    %v571 = vrot.slane %v554, 5
    %v572 = vsel %vm78, %v570, %v571
    %v573 = vrot.slane %v555, 5
    %v574 = vsel %vm78, %v571, %v573
    %v576 = vsel %vm97, %v566, %v572
    %v577 = vrot.slane %v552, 2
    %v578 = vrot.slane %v553, 2
    %v579 = vsel %vm88, %v577, %v578
    %v581 = vrot.slane %v554, 6
    %v582 = vrot.slane %v555, 6
    %v583 = vsel %vm97, %v581, %v582
    %v585 = vsel %vm97, %v578, %v581
    %v586 = vrot.slane %v552, 3
    %v587 = vrot.slane %v553, 3
    %v588 = vsel %vm107, %v586, %v587
    %v590 = vrot.slane %v554, 7
    %v591 = vrot.slane %v555, 7
    %v592 = vsel %vm116, %v590, %v591
    %v594 = vsel %vm97, %v587, %v590
    %v595 = vrot.slane %v552, 4
    %v596 = vsel %vm52, %v595, %v558
    %v598 = vsel %vm97, %v558, %v554
    %600 = vrot.lane.b32.xlu0 %v567, 84
    %v601 = vpop.permute.xlu0 %600
    %602 = vrot.lane.b32.xlu0 %v576, 84
    %v603 = vpop.permute.xlu0 %602
    %604 = vrot.lane.b32.xlu0 %v574, 84
    %v605 = vpop.permute.xlu0 %604
    %610 = vrot.lane.b32.xlu0 %v579, 40
    %v611 = vpop.permute.xlu0 %610
    %612 = vrot.lane.b32.xlu0 %v585, 40
    %v613 = vpop.permute.xlu0 %612
    %614 = vrot.lane.b32.xlu0 %v583, 40
    %v615 = vpop.permute.xlu0 %614
    %620 = vrot.lane.b32.xlu0 %v588, 124
    %v621 = vpop.permute.xlu0 %620
    %622 = vrot.lane.b32.xlu0 %v594, 124
    %v623 = vpop.permute.xlu0 %622
    %624 = vrot.lane.b32.xlu0 %v592, 124
    %v625 = vpop.permute.xlu0 %624
    %630 = vrot.lane.b32.xlu0 %v596, 80
    %v631 = vpop.permute.xlu0 %630
    %632 = vrot.lane.b32.xlu0 %v598, 80
    %v633 = vpop.permute.xlu0 %632
    %634 = vrot.lane.b32.xlu0 %v555, 80
    %v635 = vpop.permute.xlu0 %634
    %v639 = vsel %vm529, %v552, %v601
    %v640 = vsel %vm529, %v563, %v603
    %v641 = vsel %vm529, %v559, %v605
    %vm642 = vcmask 326656
    %v643 = vsel %vm642, %v601, %v611
    %v644 = vsel %vm642, %v603, %v613
    %v645 = vsel %vm642, %v605, %v615
    %vm646 = vcmask 1014784
    %v647 = vsel %vm646, %v643, %v621
    %v648 = vsel %vm646, %v644, %v623
    %v649 = vsel %vm646, %v645, %v625
    %vm650 = vcmask 654336
    %v651 = vsel %vm650, %v621, %v631
    %v652 = vsel %vm650, %v623, %v633
    %v653 = vsel %vm650, %v625, %v635
    %v654 = vpack.c.bf16 %v640, %v639
    %v655 = vpack.c.bf16 %v648, %v647
    %v656 = vpack.c.bf16 %v652, %v651
    %v657 = vpack.c.bf16 %v633, %v631
    %v658 = vpack.c.bf16 %v641, %v641
    %v659 = vpack.c.bf16 %v649, %v649
    %v660 = vpack.c.bf16 %v653, %v653
    %v661 = vpack.c.bf16 %v635, %v635
    %v662 = vld [vmem:[%s3] sm:$0xff]
    %v663 = vld [vmem:[%s3 + $0x8] sm:$0xff]
    %v664 = vld [vmem:[%s3 + $0x10] sm:$0xff]
    %v665 = vld [vmem:[%s3 + $0x18] sm:$0xff]
    %v666 = vld [vmem:[%s3 + $0x20] sm:$0xff]
    %v667 = vld [vmem:[%s3 + $0x28] sm:$0xff]
    %v668 = vld [vmem:[%s3 + $0x30] sm:$0xff]
    %v669 = vld [vmem:[%s3 + $0x38] sm:$0xff]
    %v670 = vld [vmem:[%s3 + $0x40] sm:$0xff]
    %v671 = vld [vmem:[%s3 + $0x48] sm:$0xff]
    %v672 = vld [vmem:[%s3 + $0x50] sm:$0xff]
    %v673 = vld [vmem:[%s3 + $0x58] sm:$0xff]
    %v674 = vld [vmem:[%s3 + $0x60] sm:$0xff]
    %v675 = vld [vmem:[%s3 + $0x68] sm:$0xff]
    %v676 = vld [vmem:[%s3 + $0x70] sm:$0xff]
    %v677 = vld [vmem:[%s3 + $0x78] sm:$0xff]
    %v678 = vld [vmem:[%s3 + $0x80] sm:$0xff]
    %v679 = vld [vmem:[%s3 + $0x88] sm:$0xff]
    %v680 = vld [vmem:[%s3 + $0x90] sm:$0xff]
    %v681 = vld [vmem:[%s3 + $0x98] sm:$0xff]
    %v682 = vld [vmem:[%s3 + $0xa0] sm:$0xff]
    %v683 = vld [vmem:[%s3 + $0xa8] sm:$0xff]
    %v684 = vld [vmem:[%s3 + $0xb0] sm:$0xff]
    %v685 = vld [vmem:[%s3 + $0xb8] sm:$0xff]
    %v686 = vld [vmem:[%s3 + $0xc0] sm:$0xff]
    %v687 = vld [vmem:[%s3 + $0xc8] sm:$0xff]
    %v688 = vld [vmem:[%s3 + $0xd0] sm:$0xff]
    %v689 = vld [vmem:[%s3 + $0xd8] sm:$0xff]
    %v690 = vld [vmem:[%s3 + $0xe0] sm:$0xff]
    %v691 = vld [vmem:[%s3 + $0xe8] sm:$0xff]
    %v692 = vld [vmem:[%s3 + $0xf0] sm:$0xff]
    %v693 = vld [vmem:[%s3 + $0xf8] sm:$0xff]
    %v694 = vld [vmem:[%s3 + $0x100] sm:$0xff]
    %v695 = vld [vmem:[%s3 + $0x108] sm:$0xff]
    %v696 = vld [vmem:[%s3 + $0x110] sm:$0xff]
    %v697 = vld [vmem:[%s3 + $0x118] sm:$0xff]
    %v698 = vld [vmem:[%s3 + $0x120] sm:$0xff]
    %v699 = vld [vmem:[%s3 + $0x128] sm:$0xff]
    %v700 = vld [vmem:[%s3 + $0x130] sm:$0xff]
    %v701 = vld [vmem:[%s3 + $0x138] sm:$0xff]
    %v702 = vld [vmem:[%s3 + $0x140] sm:$0xff]
    %v703 = vld [vmem:[%s3 + $0x148] sm:$0xff]
    %v704 = vld [vmem:[%s3 + $0x150] sm:$0xff]
    %v705 = vld [vmem:[%s3 + $0x158] sm:$0xff]
    %v706 = vld [vmem:[%s3 + $0x160] sm:$0xff]
    %v707 = vld [vmem:[%s3 + $0x168] sm:$0xff]
    %v708 = vld [vmem:[%s3 + $0x170] sm:$0xff]
    %v709 = vld [vmem:[%s3 + $0x178] sm:$0xff]
    %v710 = vld [vmem:[%s3 + $0x180] sm:$0xff]
    %v711 = vld [vmem:[%s3 + $0x188] sm:$0xff]
    %v712 = vld [vmem:[%s3 + $0x190] sm:$0xff]
    %v713 = vld [vmem:[%s3 + $0x198] sm:$0xff]
    %v714 = vld [vmem:[%s3 + $0x1a0] sm:$0x33]
    %v715 = vld [vmem:[%s4] sm:$0x3]
    %v717 = vlaneseq
    %v718 = vshrl.u32 %v717, 7
    %v719 = vsub.s32 0, %v718
    %v720 = vrot.slane %v715, %v719
    %v721 = vlaneseq
    %v722 = vshrl.u32 %v721, 7
    %v723 = vsub.s32 1, %v722
    %v724 = vrot.slane %v715, %v723
    %v780 = vunpack.c.l.b16 %v662
    %v781 = vunpack.c.h.b16 %v662
    %v782 = vunpack.c.l.b16 %v663
    %v783 = vunpack.c.h.b16 %v663
    %v784 = vunpack.c.l.b16 %v664
    %v785 = vunpack.c.h.b16 %v664
    %v786 = vunpack.c.l.b16 %v665
    %v787 = vunpack.c.h.b16 %v665
    %v788 = vunpack.c.l.b16 %v666
    %v789 = vunpack.c.h.b16 %v666
    %v790 = vunpack.c.l.b16 %v667
    %v791 = vunpack.c.h.b16 %v667
    %v792 = vunpack.c.l.b16 %v668
    %v793 = vunpack.c.h.b16 %v668
    %v794 = vunpack.c.l.b16 %v669
    %v795 = vunpack.c.h.b16 %v669
    %v796 = vunpack.c.l.b16 %v670
    %v797 = vunpack.c.h.b16 %v670
    %v798 = vunpack.c.l.b16 %v671
    %v799 = vunpack.c.h.b16 %v671
    %v800 = vunpack.c.l.b16 %v672
    %v801 = vunpack.c.h.b16 %v672
    %v802 = vunpack.c.l.b16 %v673
    %v803 = vunpack.c.h.b16 %v673
    %v804 = vunpack.c.l.b16 %v674
    %v805 = vunpack.c.h.b16 %v674
    %v806 = vunpack.c.l.b16 %v675
    %v807 = vunpack.c.h.b16 %v675
    %v808 = vunpack.c.l.b16 %v676
    %v809 = vunpack.c.h.b16 %v676
    %v810 = vunpack.c.l.b16 %v677
    %v811 = vunpack.c.h.b16 %v677
    %v812 = vunpack.c.l.b16 %v678
    %v813 = vunpack.c.h.b16 %v678
    %v814 = vunpack.c.l.b16 %v679
    %v815 = vunpack.c.h.b16 %v679
    %v816 = vunpack.c.l.b16 %v680
    %v817 = vunpack.c.h.b16 %v680
    %v818 = vunpack.c.l.b16 %v681
    %v819 = vunpack.c.h.b16 %v681
    %v820 = vunpack.c.l.b16 %v682
    %v821 = vunpack.c.h.b16 %v682
    %v822 = vunpack.c.l.b16 %v683
    %v823 = vunpack.c.h.b16 %v683
    %v824 = vunpack.c.l.b16 %v684
    %v825 = vunpack.c.h.b16 %v684
    %v826 = vunpack.c.l.b16 %v685
    %v827 = vunpack.c.h.b16 %v685
    %v828 = vunpack.c.l.b16 %v686
    %v829 = vunpack.c.h.b16 %v686
    %v830 = vunpack.c.l.b16 %v687
    %v831 = vunpack.c.h.b16 %v687
    %v832 = vunpack.c.l.b16 %v688
    %v833 = vunpack.c.h.b16 %v688
    %v834 = vunpack.c.l.b16 %v689
    %v835 = vunpack.c.h.b16 %v689
    %v836 = vunpack.c.l.b16 %v690
    %v837 = vunpack.c.h.b16 %v690
    %v838 = vunpack.c.l.b16 %v691
    %v839 = vunpack.c.h.b16 %v691
    %v840 = vunpack.c.l.b16 %v692
    %v841 = vunpack.c.h.b16 %v692
    %v842 = vunpack.c.l.b16 %v693
    %v843 = vunpack.c.h.b16 %v693
    %v844 = vunpack.c.l.b16 %v694
    %v845 = vunpack.c.h.b16 %v694
    %v846 = vunpack.c.l.b16 %v695
    %v847 = vunpack.c.h.b16 %v695
    %v848 = vunpack.c.l.b16 %v696
    %v849 = vunpack.c.h.b16 %v696
    %v850 = vunpack.c.l.b16 %v697
    %v851 = vunpack.c.h.b16 %v697
    %v852 = vunpack.c.l.b16 %v698
    %v853 = vunpack.c.h.b16 %v698
    %v854 = vunpack.c.l.b16 %v699
    %v855 = vunpack.c.h.b16 %v699
    %v856 = vunpack.c.l.b16 %v700
    %v857 = vunpack.c.h.b16 %v700
    %v858 = vunpack.c.l.b16 %v701
    %v859 = vunpack.c.h.b16 %v701
    %v860 = vunpack.c.l.b16 %v702
    %v861 = vunpack.c.h.b16 %v702
    %v862 = vunpack.c.l.b16 %v703
    %v863 = vunpack.c.h.b16 %v703
    %v864 = vunpack.c.l.b16 %v704
    %v865 = vunpack.c.h.b16 %v704
    %v866 = vunpack.c.l.b16 %v705
    %v867 = vunpack.c.h.b16 %v705
    %v868 = vunpack.c.l.b16 %v706
    %v869 = vunpack.c.h.b16 %v706
    %v870 = vunpack.c.l.b16 %v707
    %v871 = vunpack.c.h.b16 %v707
    %v872 = vunpack.c.l.b16 %v708
    %v873 = vunpack.c.h.b16 %v708
    %v874 = vunpack.c.l.b16 %v709
    %v875 = vunpack.c.h.b16 %v709
    %v876 = vunpack.c.l.b16 %v710
    %v877 = vunpack.c.h.b16 %v710
    %v878 = vunpack.c.l.b16 %v711
    %v879 = vunpack.c.h.b16 %v711
    %v880 = vunpack.c.l.b16 %v712
    %v881 = vunpack.c.h.b16 %v712
    %v882 = vunpack.c.l.b16 %v713
    %v883 = vunpack.c.h.b16 %v713
    %v884 = vunpack.c.l.b16 %v714
    %v885 = vunpack.c.h.b16 %v714
    %v886 = vpack.c.b16 %v782, %v780
    %v887 = vpack.c.b16 %v783, %v781
    %v888 = vpack.c.b16 %v786, %v784
    %v889 = vpack.c.b16 %v787, %v785
    %v890 = vpack.c.b16 %v790, %v788
    %v891 = vpack.c.b16 %v791, %v789
    %v892 = vpack.c.b16 %v794, %v792
    %v893 = vpack.c.b16 %v795, %v793
    %v894 = vpack.c.b16 %v798, %v796
    %v895 = vpack.c.b16 %v799, %v797
    %v896 = vpack.c.b16 %v802, %v800
    %v897 = vpack.c.b16 %v803, %v801
    %v898 = vpack.c.b16 %v806, %v804
    %v899 = vpack.c.b16 %v807, %v805
    %v900 = vpack.c.b16 %v810, %v808
    %v901 = vpack.c.b16 %v811, %v809
    %v902 = vpack.c.b16 %v814, %v812
    %v903 = vpack.c.b16 %v815, %v813
    %v904 = vpack.c.b16 %v818, %v816
    %v905 = vpack.c.b16 %v819, %v817
    %v906 = vpack.c.b16 %v822, %v820
    %v907 = vpack.c.b16 %v823, %v821
    %v908 = vpack.c.b16 %v826, %v824
    %v909 = vpack.c.b16 %v827, %v825
    %v910 = vpack.c.b16 %v830, %v828
    %v911 = vpack.c.b16 %v831, %v829
    %v912 = vpack.c.b16 %v834, %v832
    %v913 = vpack.c.b16 %v835, %v833
    %v914 = vpack.c.b16 %v838, %v836
    %v915 = vpack.c.b16 %v839, %v837
    %v916 = vpack.c.b16 %v842, %v840
    %v917 = vpack.c.b16 %v843, %v841
    %v918 = vpack.c.b16 %v846, %v844
    %v919 = vpack.c.b16 %v847, %v845
    %v920 = vpack.c.b16 %v850, %v848
    %v921 = vpack.c.b16 %v851, %v849
    %v922 = vpack.c.b16 %v854, %v852
    %v923 = vpack.c.b16 %v855, %v853
    %v924 = vpack.c.b16 %v858, %v856
    %v925 = vpack.c.b16 %v859, %v857
    %v926 = vpack.c.b16 %v862, %v860
    %v927 = vpack.c.b16 %v863, %v861
    %v928 = vpack.c.b16 %v866, %v864
    %v929 = vpack.c.b16 %v867, %v865
    %v930 = vpack.c.b16 %v870, %v868
    %v931 = vpack.c.b16 %v871, %v869
    %v932 = vpack.c.b16 %v874, %v872
    %v933 = vpack.c.b16 %v875, %v873
    %v934 = vpack.c.b16 %v878, %v876
    %v935 = vpack.c.b16 %v879, %v877
    %v936 = vpack.c.b16 %v882, %v880
    %v937 = vpack.c.b16 %v883, %v881
    %v938 = vpack.c.b16 %v884, %v884
    %v939 = vpack.c.b16 %v885, %v885
    %vm992 = vcmask 293888
    %v994 = vsel %vm992, %v657, 0
    %v997 = vsel %vm992, %v661, 0
    %v1000 = vsel %vm97, %v938, 0
    %v1003 = vsel %vm97, %v939, 0
    %1005 = vmatprep.subr.bf16.mxu0 %v887
    %1006 = vmatpush1.bf16.msra.mxu0 %v886
    %1007 = vmatprep.subr.bf16.mxu0 %v889
    %1008 = vmatpush1.bf16.msra.mxu0 %v888
    %1009 = vmatprep.subr.bf16.mxu0 %v891
    %1010 = vmatpush1.bf16.msra.mxu0 %v890
    %1011 = vmatprep.subr.bf16.mxu0 %v893
    %1012 = vmatpush1.bf16.msra.mxu0 %v892
    %1013 = vmatprep.subr.bf16.mxu0 %v895
    %1014 = vmatpush1.bf16.msra.mxu0 %v894
    %1015 = vmatprep.subr.bf16.mxu0 %v897
    %1016 = vmatpush1.bf16.msra.mxu0 %v896
    %1017 = vmatprep.subr.bf16.mxu0 %v899
    %1018 = vmatpush1.bf16.msra.mxu0 %v898
    %1019 = vmatprep.subr.bf16.mxu0 %v901
    %1020 = vmatpush1.bf16.msra.mxu0 %v900
    %1021 = vmatprep.subr.bf16.mxu0 %v903
    %1022 = vmatpush1.bf16.msra.mxu0 %v902
    %1023 = vmatprep.subr.bf16.mxu0 %v905
    %1024 = vmatpush1.bf16.msra.mxu0 %v904
    %1025 = vmatprep.subr.bf16.mxu0 %v907
    %1026 = vmatpush1.bf16.msra.mxu0 %v906
    %1027 = vmatprep.subr.bf16.mxu0 %v909
    %1028 = vmatpush1.bf16.msra.mxu0 %v908
    %1029 = vmatprep.subr.bf16.mxu0 %v911
    %1030 = vmatpush1.bf16.msra.mxu0 %v910
    %1031 = vmatprep.subr.bf16.mxu0 %v913
    %1032 = vmatpush1.bf16.msra.mxu0 %v912
    %1033 = vmatprep.subr.bf16.mxu0 %v915
    %1034 = vmatpush1.bf16.msra.mxu0 %v914
    %1035 = vmatprep.subr.bf16.mxu0 %v917
    %1036 = vmatpush1.bf16.msra.mxu0 %v916
    %1037 = vmatprep.mubr.bf16.mxu0 %v655
    %1038 = vmatmul.mubr.bf16.gmra.mrb[0].mxu0 %v654
    %v1039 = vpop.f32.mrb[0].mxu0
    %v1040 = vadd.f32 %v720, %v1039
    %v1041 = vpop.f32.mrb[0].mxu0
    %v1042 = vadd.f32 %v724, %v1041
    %v1043 = vpop.f32.mrb[0].mxu0
    %v1044 = vadd.f32 %v720, %v1043
    %v1045 = vpop.f32.mrb[0].mxu0
    %v1046 = vadd.f32 %v724, %v1045
    %1047 = vmatprep.mubr.bf16.mxu0 %v659
    %1048 = vmatmul.mubr.bf16.gmra.mrb[0].mxu0 %v658
    %v1049 = vpop.f32.mrb[0].mxu0
    %v1050 = vadd.f32 %v720, %v1049
    %v1051 = vpop.f32.mrb[0].mxu0
    %v1052 = vadd.f32 %v724, %v1051
    %v1053 = vpop.f32.mrb[0].mxu0
    %v1054 = vpop.f32.mrb[0].mxu0
    %1055 = vdwg.mxu0
    %1056 = vmatprep.subr.bf16.mxu0 %v919
    %1057 = vmatpush1.bf16.msra.mxu0 %v918
    %1058 = vmatprep.subr.bf16.mxu0 %v921
    %1059 = vmatpush1.bf16.msra.mxu0 %v920
    %1060 = vmatprep.subr.bf16.mxu0 %v923
    %1061 = vmatpush1.bf16.msra.mxu0 %v922
    %1062 = vmatprep.subr.bf16.mxu0 %v925
    %1063 = vmatpush1.bf16.msra.mxu0 %v924
    %1064 = vmatprep.subr.bf16.mxu0 %v927
    %1065 = vmatpush1.bf16.msra.mxu0 %v926
    %1066 = vmatprep.subr.bf16.mxu0 %v929
    %1067 = vmatpush1.bf16.msra.mxu0 %v928
    %1068 = vmatprep.subr.bf16.mxu0 %v931
    %1069 = vmatpush1.bf16.msra.mxu0 %v930
    %1070 = vmatprep.subr.bf16.mxu0 %v933
    %1071 = vmatpush1.bf16.msra.mxu0 %v932
    %1072 = vmatprep.subr.bf16.mxu0 %v935
    %1073 = vmatpush1.bf16.msra.mxu0 %v934
    %1074 = vmatprep.subr.bf16.mxu0 %v937
    %1075 = vmatpush1.bf16.msra.mxu0 %v936
    %1076 = vmatprep.subr.bf16.mxu0 %v1003
    %1077 = vmatpush1.bf16.msra.mxu0 %v1000
    %1078 = vmatprep.subr.bf16.mxu0 0
    %1079 = vmatpush1.bf16.msra.mxu0 0
    %1080 = vmatprep.subr.bf16.mxu0 0
    %1081 = vmatpush1.bf16.msra.mxu0 0
    %1082 = vmatprep.subr.bf16.mxu0 0
    %1083 = vmatpush1.bf16.msra.mxu0 0
    %1084 = vmatprep.subr.bf16.mxu0 0
    %1085 = vmatpush1.bf16.msra.mxu0 0
    %1086 = vmatprep.subr.bf16.mxu0 0
    %1087 = vmatpush1.bf16.msra.mxu0 0
    %1088 = vmatprep.mubr.bf16.mxu0 %v994
    %1089 = vmatmul.mubr.bf16.gmra.mrb[0].mxu0 %v656
    %v1090 = vpop.f32.mrb[0].mxu0
    %v1091 = vadd.f32 %v1040, %v1090
    %v1092 = vpop.f32.mrb[0].mxu0
    %v1093 = vadd.f32 %v1042, %v1092
    %v1094 = vpop.f32.mrb[0].mxu0
    %v1095 = vadd.f32 %v1044, %v1094
    %v1096 = vpop.f32.mrb[0].mxu0
    %v1097 = vadd.f32 %v1046, %v1096
    %1098 = vmatprep.mubr.bf16.mxu0 %v997
    %1099 = vmatmul.mubr.bf16.gmra.mrb[0].mxu0 %v660
    %v1100 = vpop.f32.mrb[0].mxu0
    %v1101 = vadd.f32 %v1050, %v1100
    %v1102 = vpop.f32.mrb[0].mxu0
    %v1103 = vadd.f32 %v1052, %v1102
    %v1104 = vpop.f32.mrb[0].mxu0
    %v1105 = vpop.f32.mrb[0].mxu0
    %1106 = vdwg.mxu0
    %v1107 = vmax.f32 %v1091, 0.0
    %v1108 = vmax.f32 %v1093, 0.0
    %v1109 = vmax.f32 %v1095, 0.0
    %v1110 = vmax.f32 %v1097, 0.0
    %v1111 = vmax.f32 %v1101, 0.0
    %v1112 = vmax.f32 %v1103, 0.0
    %1119 = vrot.lane.b32.xlu0 %v1107, 48
    %v1120 = vpop.permute.xlu0 %1119
    %1121 = vrot.lane.b32.xlu0 %v1108, 48
    %v1122 = vpop.permute.xlu0 %1121
    %1123 = vrot.lane.b32.xlu0 %v1109, 48
    %v1124 = vpop.permute.xlu0 %1123
    %1125 = vrot.lane.b32.xlu0 %v1110, 48
    %v1126 = vpop.permute.xlu0 %1125
    %1127 = vrot.lane.b32.xlu0 %v1111, 48
    %v1128 = vpop.permute.xlu0 %1127
    %1129 = vrot.lane.b32.xlu0 %v1112, 48
    %v1130 = vpop.permute.xlu0 %1129
    %vm1131 = vcmask 392192
    %v1132 = vsel %vm1131, %v1120, %v1122
    %v1133 = vsel %vm1131, %v1124, %v1126
    %v1134 = vsel %vm1131, %v1128, %v1130
    %v1138 = vmax.f32 %v1107, %v1132
    %v1139 = vmax.f32 %v1109, %v1133
    %v1140 = vmax.f32 %v1111, %v1134
    %1141 = vst.msk [vmem:[#allocation3] sm:$0xff] %vm650, %v1138
    %1142 = vst.msk [vmem:[#allocation3 + $0x8] sm:$0xff] %vm650, %v1139
    %vm1143 = vcmask 650240
    %1144 = vst.msk [vmem:[#allocation3 + $0x10] sm:$0xf] %vm1143, %v1140
    %v1145 = vld [vmem:[#allocation3] ss:$2 sm:$0xff]
    %s1146 = scalar_lea.vmem [#allocation3], 16
    %v1147 = vld [vmem:[%s1146] ss:$2 sm:$0x3]
    %s1148 = scalar_lea.vmem [#allocation3], 1
    %v1149 = vld [vmem:[%s1148] ss:$2 sm:$0xff]
    %s1150 = scalar_lea.vmem [#allocation3], 17
    %v1151 = vld [vmem:[%s1150] ss:$2 sm:$0x3]
    %v1152 = vmax.f32 %v1145, %v1149
    %v1153 = vmax.f32 %v1147, %v1151
    %v1155 = vrot.slane %v1152, 1
    %1156 = vrot.lane.b32.xlu0 %v1155, 80
    %v1157 = vpop.permute.xlu0 %1156
    %v1159 = vrot.slane %v1152, 2
    %1160 = vrot.lane.b32.xlu0 %v1159, 32
    %v1161 = vpop.permute.xlu0 %1160
    %v1163 = vrot.slane %v1152, 3
    %1164 = vrot.lane.b32.xlu0 %v1163, 112
    %v1165 = vpop.permute.xlu0 %1164
    %v1167 = vrot.slane %v1152, 4
    %1168 = vrot.lane.b32.xlu0 %v1167, 64
    %v1169 = vpop.permute.xlu0 %1168
    %v1171 = vsel %vm650, %v1152, %v1157
    %v1172 = vsel %vm204, %v1157, %v1161
    %vm1173 = vcmask 916480
    %v1174 = vsel %vm1173, %v1172, %v1165
    %v1175 = vsel %vm212, %v1165, %v1169
    %v1177 = vrot.slane %v1153, 3
    %1178 = vrot.lane.b32.xlu0 %v1177, 112
    %v1179 = vpop.permute.xlu0 %1178
    %v1181 = vrot.slane %v1153, 4
    %1182 = vrot.lane.b32.xlu0 %v1181, 64
    %v1183 = vpop.permute.xlu0 %1182
    %v1185 = vsel %vm1173, %v1172, %v1179
    %v1186 = vsel %vm212, %v1179, %v1183
    %v1190 = vrot.slane %v1171, 4
    %v1191 = vrot.slane %v1185, 4
    %v1192 = vrot.slane %v1186, 4
    %v1193 = vrot.slane %v1183, 4
    %v1198 = vsel %vm116, %v1171, %v1190
    %v1199 = vsel %vm116, %v1174, %v1191
    %v1200 = vsel %vm116, %v1175, %v1192
    %v1201 = vsel %vm116, %v1169, %v1193
    %v1202 = vpack.c.bf16 %v1198, %v1198
    %v1203 = vpack.c.bf16 %v1199, %v1199
    %v1204 = vpack.c.bf16 %v1200, %v1200
    %v1205 = vpack.c.bf16 %v1201, %v1201
    %v1206 = vld [vmem:[%s5] sm:$0xf]
    %v1207 = vld [vmem:[%s5 + $0x4] sm:$0xf]
    %v1208 = vld [vmem:[%s5 + $0x8] sm:$0xf]
    %v1209 = vld [vmem:[%s5 + $0xc] sm:$0xf]
    %v1210 = vld [vmem:[%s5 + $0x10] sm:$0xf]
    %v1211 = vld [vmem:[%s5 + $0x14] sm:$0xf]
    %v1212 = vld [vmem:[%s5 + $0x18] sm:$0xf]
    %v1213 = vld [vmem:[%s5 + $0x1c] sm:$0xf]
    %v1214 = vld [vmem:[%s5 + $0x20] sm:$0xf]
    %v1215 = vld [vmem:[%s5 + $0x24] sm:$0xf]
    %v1216 = vld [vmem:[%s5 + $0x28] sm:$0xf]
    %v1217 = vld [vmem:[%s5 + $0x2c] sm:$0xf]
    %v1218 = vld [vmem:[%s5 + $0x30] sm:$0xf]
    %v1219 = vld [vmem:[%s5 + $0x34] sm:$0xf]
    %v1220 = vld [vmem:[%s5 + $0x38] sm:$0xf]
    %v1221 = vld [vmem:[%s5 + $0x3c] sm:$0xf]
    %v1222 = vld [vmem:[%s5 + $0x40] sm:$0xf]
    %v1223 = vld [vmem:[%s5 + $0x44] sm:$0xf]
    %v1224 = vld [vmem:[%s5 + $0x48] sm:$0xf]
    %v1225 = vld [vmem:[%s5 + $0x4c] sm:$0xf]
    %v1226 = vld [vmem:[%s5 + $0x50] sm:$0xf]
    %v1227 = vld [vmem:[%s5 + $0x54] sm:$0xf]
    %v1228 = vld [vmem:[%s5 + $0x58] sm:$0xf]
    %v1229 = vld [vmem:[%s5 + $0x5c] sm:$0xf]
    %v1230 = vld [vmem:[%s5 + $0x60] sm:$0xf]
    %v1231 = vld [vmem:[%s5 + $0x64] sm:$0xf]
    %v1232 = vld [vmem:[%s5 + $0x68] sm:$0xf]
    %v1233 = vld [vmem:[%s5 + $0x6c] sm:$0xf]
    %v1234 = vld [vmem:[%s5 + $0x70] sm:$0xf]
    %v1235 = vld [vmem:[%s5 + $0x74] sm:$0xf]
    %v1236 = vld [vmem:[%s5 + $0x78] sm:$0xf]
    %v1237 = vld [vmem:[%s5 + $0x7c] sm:$0xf]
    %v1238 = vld [vmem:[%s5 + $0x80] sm:$0xf]
    %v1239 = vld [vmem:[%s5 + $0x84] sm:$0xf]
    %v1240 = vld [vmem:[%s5 + $0x88] sm:$0xf]
    %v1241 = vld [vmem:[%s5 + $0x8c] sm:$0xf]
    %v1242 = vld [vmem:[%s5 + $0x90] sm:$0xf]
    %v1243 = vld [vmem:[%s5 + $0x94] sm:$0xf]
    %v1244 = vld [vmem:[%s5 + $0x98] sm:$0xf]
    %v1245 = vld [vmem:[%s5 + $0x9c] sm:$0xf]
    %v1246 = vld [vmem:[%s5 + $0xa0] sm:$0xf]
    %v1247 = vld [vmem:[%s5 + $0xa4] sm:$0xf]
    %v1248 = vld [vmem:[%s5 + $0xa8] sm:$0xf]
    %v1249 = vld [vmem:[%s5 + $0xac] sm:$0xf]
    %v1250 = vld [vmem:[%s5 + $0xb0] sm:$0xf]
    %v1251 = vld [vmem:[%s5 + $0xb4] sm:$0xf]
    %v1252 = vld [vmem:[%s5 + $0xb8] sm:$0xf]
    %v1253 = vld [vmem:[%s5 + $0xbc] sm:$0xf]
    %v1254 = vld [vmem:[%s5 + $0xc0] sm:$0xf]
    %v1255 = vld [vmem:[%s5 + $0xc4] sm:$0xf]
    %v1256 = vld [vmem:[%s6] sm:$0x1]
    %v1258 = vlaneseq
    %v1259 = vshrl.u32 %v1258, 7
    %v1260 = vsub.s32 0, %v1259
    %v1261 = vrot.slane %v1256, %v1260
    %v1313 = vunpack.c.l.b16 %v1206
    %v1314 = vunpack.c.l.b16 %v1207
    %v1315 = vunpack.c.l.b16 %v1208
    %v1316 = vunpack.c.l.b16 %v1209
    %v1317 = vunpack.c.l.b16 %v1210
    %v1318 = vunpack.c.l.b16 %v1211
    %v1319 = vunpack.c.l.b16 %v1212
    %v1320 = vunpack.c.l.b16 %v1213
    %v1321 = vunpack.c.l.b16 %v1214
    %v1322 = vunpack.c.l.b16 %v1215
    %v1323 = vunpack.c.l.b16 %v1216
    %v1324 = vunpack.c.l.b16 %v1217
    %v1325 = vunpack.c.l.b16 %v1218
    %v1326 = vunpack.c.l.b16 %v1219
    %v1327 = vunpack.c.l.b16 %v1220
    %v1328 = vunpack.c.l.b16 %v1221
    %v1329 = vunpack.c.l.b16 %v1222
    %v1330 = vunpack.c.l.b16 %v1223
    %v1331 = vunpack.c.l.b16 %v1224
    %v1332 = vunpack.c.l.b16 %v1225
    %v1333 = vunpack.c.l.b16 %v1226
    %v1334 = vunpack.c.l.b16 %v1227
    %v1335 = vunpack.c.l.b16 %v1228
    %v1336 = vunpack.c.l.b16 %v1229
    %v1337 = vunpack.c.l.b16 %v1230
    %v1338 = vunpack.c.l.b16 %v1231
    %v1339 = vunpack.c.l.b16 %v1232
    %v1340 = vunpack.c.l.b16 %v1233
    %v1341 = vunpack.c.l.b16 %v1234
    %v1342 = vunpack.c.l.b16 %v1235
    %v1343 = vunpack.c.l.b16 %v1236
    %v1344 = vunpack.c.l.b16 %v1237
    %v1345 = vunpack.c.l.b16 %v1238
    %v1346 = vunpack.c.l.b16 %v1239
    %v1347 = vunpack.c.l.b16 %v1240
    %v1348 = vunpack.c.l.b16 %v1241
    %v1349 = vunpack.c.l.b16 %v1242
    %v1350 = vunpack.c.l.b16 %v1243
    %v1351 = vunpack.c.l.b16 %v1244
    %v1352 = vunpack.c.l.b16 %v1245
    %v1353 = vunpack.c.l.b16 %v1246
    %v1354 = vunpack.c.l.b16 %v1247
    %v1355 = vunpack.c.l.b16 %v1248
    %v1356 = vunpack.c.l.b16 %v1249
    %v1357 = vunpack.c.l.b16 %v1250
    %v1358 = vunpack.c.l.b16 %v1251
    %v1359 = vunpack.c.l.b16 %v1252
    %v1360 = vunpack.c.l.b16 %v1253
    %v1361 = vunpack.c.l.b16 %v1254
    %v1362 = vunpack.c.l.b16 %v1255
    %v1363 = vpack.c.b16 %v1314, %v1313
    %v1364 = vpack.c.b16 %v1316, %v1315
    %v1365 = vpack.c.b16 %v1318, %v1317
    %v1366 = vpack.c.b16 %v1320, %v1319
    %v1367 = vpack.c.b16 %v1322, %v1321
    %v1368 = vpack.c.b16 %v1324, %v1323
    %v1369 = vpack.c.b16 %v1326, %v1325
    %v1370 = vpack.c.b16 %v1328, %v1327
    %v1371 = vpack.c.b16 %v1330, %v1329
    %v1372 = vpack.c.b16 %v1332, %v1331
    %v1373 = vpack.c.b16 %v1334, %v1333
    %v1374 = vpack.c.b16 %v1336, %v1335
    %v1375 = vpack.c.b16 %v1338, %v1337
    %v1376 = vpack.c.b16 %v1340, %v1339
    %v1377 = vpack.c.b16 %v1342, %v1341
    %v1378 = vpack.c.b16 %v1344, %v1343
    %v1379 = vpack.c.b16 %v1346, %v1345
    %v1380 = vpack.c.b16 %v1348, %v1347
    %v1381 = vpack.c.b16 %v1350, %v1349
    %v1382 = vpack.c.b16 %v1352, %v1351
    %v1383 = vpack.c.b16 %v1354, %v1353
    %v1384 = vpack.c.b16 %v1356, %v1355
    %v1385 = vpack.c.b16 %v1358, %v1357
    %v1386 = vpack.c.b16 %v1360, %v1359
    %v1387 = vpack.c.b16 %v1362, %v1361
    %vm1413 = vcmask 130048
    %v1415 = vsel %vm1413, %v1205, 0
    %1417 = vmatprep.subr.bf16.mxu0 0
    %1418 = vmatpush1.bf16.msra.mxu0 %v1363
    %1419 = vmatprep.subr.bf16.mxu0 0
    %1420 = vmatpush1.bf16.msra.mxu0 %v1364
    %1421 = vmatprep.subr.bf16.mxu0 0
    %1422 = vmatpush1.bf16.msra.mxu0 %v1365
    %1423 = vmatprep.subr.bf16.mxu0 0
    %1424 = vmatpush1.bf16.msra.mxu0 %v1366
    %1425 = vmatprep.subr.bf16.mxu0 0
    %1426 = vmatpush1.bf16.msra.mxu0 %v1367
    %1427 = vmatprep.subr.bf16.mxu0 0
    %1428 = vmatpush1.bf16.msra.mxu0 %v1368
    %1429 = vmatprep.subr.bf16.mxu0 0
    %1430 = vmatpush1.bf16.msra.mxu0 %v1369
    %1431 = vmatprep.subr.bf16.mxu0 0
    %1432 = vmatpush1.bf16.msra.mxu0 %v1370
    %1433 = vmatprep.subr.bf16.mxu0 0
    %1434 = vmatpush1.bf16.msra.mxu0 %v1371
    %1435 = vmatprep.subr.bf16.mxu0 0
    %1436 = vmatpush1.bf16.msra.mxu0 %v1372
    %1437 = vmatprep.subr.bf16.mxu0 0
    %1438 = vmatpush1.bf16.msra.mxu0 %v1373
    %1439 = vmatprep.subr.bf16.mxu0 0
    %1440 = vmatpush1.bf16.msra.mxu0 %v1374
    %1441 = vmatprep.subr.bf16.mxu0 0
    %1442 = vmatpush1.bf16.msra.mxu0 %v1375
    %1443 = vmatprep.subr.bf16.mxu0 0
    %1444 = vmatpush1.bf16.msra.mxu0 %v1376
    %1445 = vmatprep.subr.bf16.mxu0 0
    %1446 = vmatpush1.bf16.msra.mxu0 %v1377
    %1447 = vmatprep.subr.bf16.mxu0 0
    %1448 = vmatpush1.bf16.msra.mxu0 %v1378
    %1449 = vmatprep.mubr.bf16.mxu0 %v1203
    %1450 = vmatmul.mubr.bf16.gmra.mrb[0].mxu0 %v1202
    %v1451 = vpop.f32.mrb[0].mxu0
    %v1452 = vadd.f32 %v1261, %v1451
    %v1453 = vpop.f32.mrb[0].mxu0
    %v1454 = vpop.f32.mrb[0].mxu0
    %v1455 = vpop.f32.mrb[0].mxu0
    %1456 = vdwg.mxu0
    %1457 = vmatprep.subr.bf16.mxu0 0
    %1458 = vmatpush1.bf16.msra.mxu0 %v1379
    %1459 = vmatprep.subr.bf16.mxu0 0
    %1460 = vmatpush1.bf16.msra.mxu0 %v1380
    %1461 = vmatprep.subr.bf16.mxu0 0
    %1462 = vmatpush1.bf16.msra.mxu0 %v1381
    %1463 = vmatprep.subr.bf16.mxu0 0
    %1464 = vmatpush1.bf16.msra.mxu0 %v1382
    %1465 = vmatprep.subr.bf16.mxu0 0
    %1466 = vmatpush1.bf16.msra.mxu0 %v1383
    %1467 = vmatprep.subr.bf16.mxu0 0
    %1468 = vmatpush1.bf16.msra.mxu0 %v1384
    %1469 = vmatprep.subr.bf16.mxu0 0
    %1470 = vmatpush1.bf16.msra.mxu0 %v1385
    %1471 = vmatprep.subr.bf16.mxu0 0
    %1472 = vmatpush1.bf16.msra.mxu0 %v1386
    %1473 = vmatprep.subr.bf16.mxu0 0
    %1474 = vmatpush1.bf16.msra.mxu0 %v1387
    %1475 = vmatprep.subr.bf16.mxu0 0
    %1476 = vmatpush1.bf16.msra.mxu0 0
    %1477 = vmatprep.subr.bf16.mxu0 0
    %1478 = vmatpush1.bf16.msra.mxu0 0
    %1479 = vmatprep.subr.bf16.mxu0 0
    %1480 = vmatpush1.bf16.msra.mxu0 0
    %1481 = vmatprep.subr.bf16.mxu0 0
    %1482 = vmatpush1.bf16.msra.mxu0 0
    %1483 = vmatprep.subr.bf16.mxu0 0
    %1484 = vmatpush1.bf16.msra.mxu0 0
    %1485 = vmatprep.subr.bf16.mxu0 0
    %1486 = vmatpush1.bf16.msra.mxu0 0
    %1487 = vmatprep.subr.bf16.mxu0 0
    %1488 = vmatpush1.bf16.msra.mxu0 0
    %1489 = vmatprep.mubr.bf16.mxu0 %v1415
    %1490 = vmatmul.mubr.bf16.gmra.mrb[0].mxu0 %v1204
    %v1491 = vpop.f32.mrb[0].mxu0
    %v1492 = vadd.f32 %v1452, %v1491
    %v1493 = vpop.f32.mrb[0].mxu0
    %v1494 = vpop.f32.mrb[0].mxu0
    %v1495 = vpop.f32.mrb[0].mxu0
    %1496 = vdwg.mxu0
    %v1497 = vmax.f32 %v1492, 0.0
    %v1498 = vpack.c.bf16 %v1497, %v1497
    %v1499 = vld [vmem:[%s7] sm:$0xf]
    %v1500 = vld [vmem:[%s7 + $0x4] sm:$0xf]
    %v1501 = vld [vmem:[%s7 + $0x8] sm:$0xf]
    %v1502 = vld [vmem:[%s7 + $0xc] sm:$0xf]
    %v1503 = vld [vmem:[%s7 + $0x10] sm:$0xf]
    %v1504 = vld [vmem:[%s7 + $0x14] sm:$0xf]
    %v1505 = vld [vmem:[%s7 + $0x18] sm:$0xf]
    %v1506 = vld [vmem:[%s7 + $0x1c] sm:$0xf]
    %v1507 = vld [vmem:[%s7 + $0x20] sm:$0xf]
    %v1508 = vld [vmem:[%s7 + $0x24] sm:$0xf]
    %v1509 = vld [vmem:[%s7 + $0x28] sm:$0xf]
    %v1510 = vld [vmem:[%s7 + $0x2c] sm:$0xf]
    %v1511 = vld [vmem:[%s7 + $0x30] sm:$0xf]
    %v1512 = vld [vmem:[%s7 + $0x34] sm:$0xf]
    %v1513 = vld [vmem:[%s7 + $0x38] sm:$0xf]
    %v1514 = vld [vmem:[%s8] sm:$0x1]
    %v1516 = vlaneseq
    %v1517 = vshrl.u32 %v1516, 7
    %v1518 = vsub.s32 0, %v1517
    %v1519 = vrot.slane %v1514, %v1518
    %v1536 = vunpack.c.l.b16 %v1499
    %v1537 = vunpack.c.l.b16 %v1500
    %v1538 = vunpack.c.l.b16 %v1501
    %v1539 = vunpack.c.l.b16 %v1502
    %v1540 = vunpack.c.l.b16 %v1503
    %v1541 = vunpack.c.l.b16 %v1504
    %v1542 = vunpack.c.l.b16 %v1505
    %v1543 = vunpack.c.l.b16 %v1506
    %v1544 = vunpack.c.l.b16 %v1507
    %v1545 = vunpack.c.l.b16 %v1508
    %v1546 = vunpack.c.l.b16 %v1509
    %v1547 = vunpack.c.l.b16 %v1510
    %v1548 = vunpack.c.l.b16 %v1511
    %v1549 = vunpack.c.l.b16 %v1512
    %v1550 = vunpack.c.l.b16 %v1513
    %v1551 = vpack.c.b16 %v1537, %v1536
    %v1552 = vpack.c.b16 %v1539, %v1538
    %v1553 = vpack.c.b16 %v1541, %v1540
    %v1554 = vpack.c.b16 %v1543, %v1542
    %v1555 = vpack.c.b16 %v1545, %v1544
    %v1556 = vpack.c.b16 %v1547, %v1546
    %v1557 = vpack.c.b16 %v1549, %v1548
    %v1558 = vpack.c.b16 %v1550, %v1550
    %vm1566 = vcmask 982016
    %v1568 = vsel %vm1566, %v1498, 0
    %v1571 = vsel %vm52, %v1558, 0
    %1573 = vmatprep.subr.bf16.mxu0 0
    %1574 = vmatpush1.bf16.msra.mxu0 %v1551
    %1575 = vmatprep.subr.bf16.mxu0 0
    %1576 = vmatpush1.bf16.msra.mxu0 %v1552
    %1577 = vmatprep.subr.bf16.mxu0 0
    %1578 = vmatpush1.bf16.msra.mxu0 %v1553
    %1579 = vmatprep.subr.bf16.mxu0 0
    %1580 = vmatpush1.bf16.msra.mxu0 %v1554
    %1581 = vmatprep.subr.bf16.mxu0 0
    %1582 = vmatpush1.bf16.msra.mxu0 %v1555
    %1583 = vmatprep.subr.bf16.mxu0 0
    %1584 = vmatpush1.bf16.msra.mxu0 %v1556
    %1585 = vmatprep.subr.bf16.mxu0 0
    %1586 = vmatpush1.bf16.msra.mxu0 %v1557
    %1587 = vmatprep.subr.bf16.mxu0 0
    %1588 = vmatpush1.bf16.msra.mxu0 %v1571
    %1589 = vmatprep.subr.bf16.mxu0 0
    %1590 = vmatpush1.bf16.msra.mxu0 0
    %1591 = vmatprep.subr.bf16.mxu0 0
    %1592 = vmatpush1.bf16.msra.mxu0 0
    %1593 = vmatprep.subr.bf16.mxu0 0
    %1594 = vmatpush1.bf16.msra.mxu0 0
    %1595 = vmatprep.subr.bf16.mxu0 0
    %1596 = vmatpush1.bf16.msra.mxu0 0
    %1597 = vmatprep.subr.bf16.mxu0 0
    %1598 = vmatpush1.bf16.msra.mxu0 0
    %1599 = vmatprep.subr.bf16.mxu0 0
    %1600 = vmatpush1.bf16.msra.mxu0 0
    %1601 = vmatprep.subr.bf16.mxu0 0
    %1602 = vmatpush1.bf16.msra.mxu0 0
    %1603 = vmatprep.subr.bf16.mxu0 0
    %1604 = vmatpush1.bf16.msra.mxu0 0
    %1605 = vmatprep.mubr.bf16.mxu0 0
    %1606 = vmatmul.mubr.bf16.gmra.mrb[0].mxu0 %v1568
    %v1607 = vpop.f32.mrb[0].mxu0
    %v1608 = vadd.f32 %v1519, %v1607
    %v1609 = vpop.f32.mrb[0].mxu0
    %v1610 = vpop.f32.mrb[0].mxu0
    %v1611 = vpop.f32.mrb[0].mxu0
    %1612 = vdwg.mxu0
    %v1613 = vmax.f32 %v1608, 0.0
    %v1614 = vpack.c.bf16 %v1613, %v1613
    %v1615 = vld [vmem:[%s9] sm:$0xf]
    %v1616 = vld [vmem:[%s9 + $0x4] sm:$0xf]
    %v1617 = vld [vmem:[%s9 + $0x8] sm:$0xf]
    %v1618 = vld [vmem:[%s9 + $0xc] sm:$0xf]
    %v1619 = vld [vmem:[%s9 + $0x10] sm:$0xf]
    %v1620 = vld [vmem:[%s9 + $0x14] sm:$0xf]
    %v1621 = vld [vmem:[%s9 + $0x18] sm:$0xf]
    %v1622 = vld [vmem:[%s9 + $0x1c] sm:$0xf]
    %v1623 = vld [vmem:[%s9 + $0x20] sm:$0xf]
    %v1624 = vld [vmem:[%s9 + $0x24] sm:$0xf]
    %v1625 = vld [vmem:[%s9 + $0x28] sm:$0x3]
    %v1626 = vld [vmem:[%s10] sm:$0x1]
    %v1628 = vlaneseq
    %v1629 = vshrl.u32 %v1628, 7
    %v1630 = vsub.s32 0, %v1629
    %v1631 = vrot.slane %v1626, %v1630
    %v1644 = vunpack.c.l.b16 %v1615
    %v1645 = vunpack.c.l.b16 %v1616
    %v1646 = vunpack.c.l.b16 %v1617
    %v1647 = vunpack.c.l.b16 %v1618
    %v1648 = vunpack.c.l.b16 %v1619
    %v1649 = vunpack.c.l.b16 %v1620
    %v1650 = vunpack.c.l.b16 %v1621
    %v1651 = vunpack.c.l.b16 %v1622
    %v1652 = vunpack.c.l.b16 %v1623
    %v1653 = vunpack.c.l.b16 %v1624
    %v1654 = vunpack.c.l.b16 %v1625
    %v1655 = vpack.c.b16 %v1645, %v1644
    %v1656 = vpack.c.b16 %v1647, %v1646
    %v1657 = vpack.c.b16 %v1649, %v1648
    %v1658 = vpack.c.b16 %v1651, %v1650
    %v1659 = vpack.c.b16 %v1653, %v1652
    %v1660 = vpack.c.b16 %v1654, %v1654
    %v1667 = vsel %vm529, %v1614, 0
    %v1670 = vsel %vm97, %v1660, 0
    %1672 = vmatprep.subr.bf16.mxu0 0
    %1673 = vmatpush1.bf16.msra.mxu0 %v1655
    %1674 = vmatprep.subr.bf16.mxu0 0
    %1675 = vmatpush1.bf16.msra.mxu0 %v1656
    %1676 = vmatprep.subr.bf16.mxu0 0
    %1677 = vmatpush1.bf16.msra.mxu0 %v1657
    %1678 = vmatprep.subr.bf16.mxu0 0
    %1679 = vmatpush1.bf16.msra.mxu0 %v1658
    %1680 = vmatprep.subr.bf16.mxu0 0
    %1681 = vmatpush1.bf16.msra.mxu0 %v1659
    %1682 = vmatprep.subr.bf16.mxu0 0
    %1683 = vmatpush1.bf16.msra.mxu0 %v1670
    %1684 = vmatprep.subr.bf16.mxu0 0
    %1685 = vmatpush1.bf16.msra.mxu0 0
    %1686 = vmatprep.subr.bf16.mxu0 0
    %1687 = vmatpush1.bf16.msra.mxu0 0
    %1688 = vmatprep.subr.bf16.mxu0 0
    %1689 = vmatpush1.bf16.msra.mxu0 0
    %1690 = vmatprep.subr.bf16.mxu0 0
    %1691 = vmatpush1.bf16.msra.mxu0 0
    %1692 = vmatprep.subr.bf16.mxu0 0
    %1693 = vmatpush1.bf16.msra.mxu0 0
    %1694 = vmatprep.subr.bf16.mxu0 0
    %1695 = vmatpush1.bf16.msra.mxu0 0
    %1696 = vmatprep.subr.bf16.mxu0 0
    %1697 = vmatpush1.bf16.msra.mxu0 0
    %1698 = vmatprep.subr.bf16.mxu0 0
    %1699 = vmatpush1.bf16.msra.mxu0 0
    %1700 = vmatprep.subr.bf16.mxu0 0
    %1701 = vmatpush1.bf16.msra.mxu0 0
    %1702 = vmatprep.subr.bf16.mxu0 0
    %1703 = vmatpush1.bf16.msra.mxu0 0
    %1704 = vmatprep.mubr.bf16.mxu0 0
    %1705 = vmatmul.mubr.bf16.gmra.mrb[0].mxu0 %v1667
    %v1706 = vpop.f32.mrb[0].mxu0
    %v1707 = vadd.f32 %v1631, %v1706
    %v1708 = vpop.f32.mrb[0].mxu0
    %v1709 = vpop.f32.mrb[0].mxu0
    %v1710 = vpop.f32.mrb[0].mxu0
    %1711 = vdwg.mxu0
    %1712 = vst [vmem:[#allocation4] sm:$0x3] %v1707
    // Predicated region
    $region46: #{tpu_custom_call.1} parent=1 // pred_check
      _
    $region47: #{tpu_custom_call.1} parent=1 // pred_check_branch
      %1714 = sbr.rel (0) target = $region49
    $region48: #{tpu_custom_call.1} parent=1 // pred_region
      %s1716 = ssub.s32 32, 32
      %1717 = vsyncadd [#allocation5], %s1716
      %s1719 = sshll.u32 [#allocation4], 4
      %s1720 = int_to_ptr.vmem [resolvable:$true] %s1719
      %1722 = dma.vmem_to_hbm [thread:$0]  %s1720, 32, %s11, [#allocation5]
    $region49: #{tpu_custom_call.1} parent=1 // pred_fallthru
      _
    // Predicated region
    $region50: #{tpu_custom_call.1} parent=1 // pred_check
      _
    $region51: #{tpu_custom_call.1} parent=1 // pred_check_branch
      %1724 = sbr.rel (0) target = $region53
    $region52: #{tpu_custom_call.1} parent=1 // pred_region
      %1725 = dma.done [#allocation5], 32
    $region53: #{tpu_custom_call.1} parent=1 // pred_fallthru
      _
    %1726 = vsyncpa [#allocation5], 1

</llo_original>
